<compile_context>
chip_gen: v5e
topology: v5e:2x2
jax: 0.10.0
libtpu: 0.0.40
codegen_flags: <defaults>
</compile_context>

<pallas_src>
import jax
import jax.numpy as jnp
from jax.experimental import pallas as pl
from jax.experimental.pallas import tpu as pltpu
import numpy as np

# Problem sizes (consistent with the module's __init__)
STATE_DIM = 16
NUM_FAKE_FEATURES = 4
DIM_STATE_WITH_FAKE = STATE_DIM + NUM_FAKE_FEATURES  # 20
HIDDEN_DIM = 32
ACTION_DIM = 6
ACTION_PAD = 8            # narrow output pad (was 128): same vst count, ~16x fewer HBM bytes

ACTION_SCALE = 1.0        # action_space is None
ACTION_BIAS = 0.0

TILE_B = 1024             # batch rows per grid step (overhead-bound workload -> big tiles)
MIN_PALLAS_BATCH = 512    # below this, fused XLA path beats kernel launch overhead


def policy_kernel(s_ref, w1_ref, b1_ref, w2_ref, b2_ref, w3_ref, b3_ref, out_ref):
    # One batch tile per grid step; weights are VMEM-resident across steps
    # (constant block indices). Three MXU matmuls, ReLU on the VPU, tanh on the EUP.
    x = s_ref[...]                                                       # (tb, 16)
    h1 = jnp.dot(x, w1_ref[...], preferred_element_type=jnp.float32) + b1_ref[...]
    h1 = jnp.maximum(h1, 0.0)                                            # ReLU
    h2 = jnp.dot(h1, w2_ref[...], preferred_element_type=jnp.float32) + b2_ref[...]
    h2 = jnp.maximum(h2, 0.0)                                            # ReLU
    m = jnp.tanh(jnp.dot(h2, w3_ref[...], preferred_element_type=jnp.float32) + b3_ref[...])
    if ACTION_SCALE != 1.0 or ACTION_BIAS != 0.0:  # Python-level: not emitted here
        m = m * ACTION_SCALE + ACTION_BIAS
    out_ref[...] = m.astype(out_ref.dtype)                               # (tb, 8)


def prepare_params(w1, b1, w2, b2, w3, b3):
    """One-time parameter transform (do NOT call per step).

    - Drops W1's fake-feature rows (they only ever multiply zero inputs).
    - Zero-pads W3/b3 to an 8-wide output (tanh(0)=0 keeps pad columns zero).
    """
    w1e = w1[:STATE_DIM, :]                                              # (16, 32)
    w3p = jnp.zeros((HIDDEN_DIM, ACTION_PAD), w3.dtype).at[:, :ACTION_DIM].set(w3)
    b3p = jnp.zeros((1, ACTION_PAD), b3.dtype).at[:, :ACTION_DIM].set(b3)
    return (w1e, b1, w2, b2, w3p, b3p)


def _round_up(x, m):
    return ((x + m - 1) // m) * m


def _tile_rows(B, tile_b):
    """Rows per grid step: big tiles (per-step-overhead-bound workload), but at
    least 2 grid steps on large batches so v7x megacore can shard the
    'parallel' batch axis across both TensorCores. Rows kept a multiple of 8."""
    if B >= 2 * tile_b:
        return tile_b
    half = _round_up((B + 1) // 2, 8)
    if half >= 256:                    # still enough work per tile to amortize overhead
        return half
    return _round_up(max(B, 8), 8)     # small batch: single tile


def _jnp_forward(state, params):
    # Fast path for small batches (RL actor per-env-step latency): XLA fuses
    # the three tiny layers; pallas_call launch overhead would dominate.
    w1e, b1, w2, b2, w3p, b3p = params
    h1 = jnp.maximum(state @ w1e + b1, 0.0)
    h2 = jnp.maximum(h1 @ w2 + b2, 0.0)
    m = jnp.tanh(h2 @ w3p + b3p)
    return m[:, :ACTION_DIM]


def deterministic_policy_forward(state, params, *, tile_b=TILE_B, use_pallas=None):
    """state: (B, STATE_DIM) float32. Returns mean action (B, ACTION_DIM) float32."""
    B = state.shape[0]
    if use_pallas is None:
        use_pallas = B >= MIN_PALLAS_BATCH
    if not use_pallas:
        return _jnp_forward(state, params)

    w1e, b1, w2, b2, w3p, b3p = params
    tb = _tile_rows(B, tile_b)
    n_tiles = pl.cdiv(B, tb)
    Bp = n_tiles * tb
    if Bp != B:                                # static check; pad batch to tile multiple
        state = jnp.pad(state, ((0, Bp - B), (0, 0)))

    const = lambda shape: pl.BlockSpec(shape, lambda i: (0,) * len(shape))

    # Advisory cost hint so XLA schedules this tiny custom call sensibly.
    flops = 2 * Bp * (STATE_DIM * HIDDEN_DIM + HIDDEN_DIM * HIDDEN_DIM
                      + HIDDEN_DIM * ACTION_PAD)
    bytes_accessed = 4 * (Bp * STATE_DIM + Bp * ACTION_PAD
                          + STATE_DIM * HIDDEN_DIM + HIDDEN_DIM
                          + HIDDEN_DIM * HIDDEN_DIM + HIDDEN_DIM
                          + HIDDEN_DIM * ACTION_PAD + ACTION_PAD)

    out = pl.pallas_call(
        policy_kernel,
        out_shape=jax.ShapeDtypeStruct((Bp, ACTION_PAD), jnp.float32),
        grid=(n_tiles,),
        in_specs=[
            pl.BlockSpec((tb, STATE_DIM), lambda i: (i, 0)),             # per-tile state
            const((STATE_DIM, HIDDEN_DIM)),                              # weights: resident
            const((1, HIDDEN_DIM)),
            const((HIDDEN_DIM, HIDDEN_DIM)),
            const((1, HIDDEN_DIM)),
            const((HIDDEN_DIM, ACTION_PAD)),
            const((1, ACTION_PAD)),
        ],
        out_specs=pl.BlockSpec((tb, ACTION_PAD), lambda i: (i, 0)),
        compiler_params=pltpu.CompilerParams(
            dimension_semantics=("parallel",),
            vmem_limit_bytes=32 * 1024 * 1024,
        ),
        cost_estimate=pl.CostEstimate(
            flops=flops,
            transcendentals=Bp * ACTION_PAD,
            bytes_accessed=bytes_accessed,
        ),
    )(state, w1e, b1, w2, b2, w3p, b3p)

    return out[:B, :ACTION_DIM]


def xavier_uniform(key, fan_in, fan_out, gain=1.0):
    # torch.nn.init.xavier_uniform_: U(-a, a), a = gain * sqrt(6 / (fan_in + fan_out))
    bound = gain * np.sqrt(6.0 / (fan_in + fan_out))
    return jax.random.uniform(key, (fan_in, fan_out), jnp.float32, -bound, bound)


def _reference(state, w1, b1, w2, b2, w3, b3):
    # Pure-JAX reference with the *original* module layout (zero fake features, full W1).
    B = state.shape[0]
    x = jnp.concatenate([state, jnp.zeros((B, NUM_FAKE_FEATURES), state.dtype)], -1)
    h1 = jnp.maximum(x @ w1 + b1, 0.0)
    h2 = jnp.maximum(h1 @ w2 + b2, 0.0)
    return jnp.tanh(h2 @ w3 + b3) * ACTION_SCALE + ACTION_BIAS


if __name__ == "__main__":
    key = jax.random.PRNGKey(0)
    k_s1, k_s2, k_s3, k_s4, k1, k2, k3 = jax.random.split(key, 7)

    # Deterministic parameter init (xavier_uniform weights, zero biases), stored
    # as (in, out) so the kernel computes x @ W + b (== PyTorch x @ W.T).
    w1 = xavier_uniform(k1, DIM_STATE_WITH_FAKE, HIDDEN_DIM)
    b1 = jnp.zeros((1, HIDDEN_DIM), jnp.float32)
    w2 = xavier_uniform(k2, HIDDEN_DIM, HIDDEN_DIM)
    b2 = jnp.zeros((1, HIDDEN_DIM), jnp.float32)
    w3 = xavier_uniform(k3, HIDDEN_DIM, ACTION_DIM)
    b3 = jnp.zeros((1, ACTION_DIM), jnp.float32)

    params = prepare_params(w1, b1, w2, b2, w3, b3)   # one-time transform

    def check(state, **kw):
        got = jax.block_until_ready(deterministic_policy_forward(state, params, **kw))
        ref = _reference(state, w1, b1, w2, b2, w3, b3)
        np.testing.assert_allclose(np.asarray(got), np.asarray(ref), rtol=1e-5, atol=1e-5)

    # Rollout batch, even tile split: 2 tiles of 1024 (exercises v7x parallel sharding).
    check(jax.random.normal(k_s1, (2048, STATE_DIM), jnp.float32))
    # Rollout batch needing batch padding: 2 tiles of 752, 4 padded rows sliced away.
    check(jax.random.normal(k_s2, (1500, STATE_DIM), jnp.float32))
    # Small batch: auto-dispatch takes the fused plain-jnp fast path.
    check(jax.random.normal(k_s3, (8, STATE_DIM), jnp.float32))
    # Small batch forced through the kernel: single padded tile (100 -> 104 rows).
    check(jax.random.normal(k_s4, (100, STATE_DIM), jnp.float32), use_pallas=True)

    print("KERNEL_OK")
</pallas_src>

<mosaic_0001>
module attributes {stable_mosaic.version = 11 : i64} {
  func.func @policy_kernel(%arg0: i32, %arg1: memref<1024x16xf32, #tpu.memory_space<vmem>>, %arg2: memref<16x32xf32, #tpu.memory_space<vmem>>, %arg3: memref<1x32xf32, #tpu.memory_space<vmem>>, %arg4: memref<32x32xf32, #tpu.memory_space<vmem>>, %arg5: memref<1x32xf32, #tpu.memory_space<vmem>>, %arg6: memref<32x8xf32, #tpu.memory_space<vmem>>, %arg7: memref<1x8xf32, #tpu.memory_space<vmem>>, %arg8: memref<1024x8xf32, #tpu.memory_space<vmem>>) attributes {dimension_semantics = [#tpu.dimension_semantics<parallel>], iteration_bounds = array<i64: 2>, scalar_prefetch = 0 : i64, scratch_operands = 0 : i64, tpu.core_type = #tpu.core_type<tc>, window_params = [{transform_indices = @transform_0, window_bounds = array<i64: 1024, 16>}, {pipeline_mode = #tpu.pipeline_mode<synchronous>, transform_indices = @transform_1, window_bounds = array<i64: 16, 32>}, {pipeline_mode = #tpu.pipeline_mode<synchronous>, transform_indices = @transform_2, window_bounds = array<i64: 1, 32>}, {pipeline_mode = #tpu.pipeline_mode<synchronous>, transform_indices = @transform_3, window_bounds = array<i64: 32, 32>}, {pipeline_mode = #tpu.pipeline_mode<synchronous>, transform_indices = @transform_4, window_bounds = array<i64: 1, 32>}, {pipeline_mode = #tpu.pipeline_mode<synchronous>, transform_indices = @transform_5, window_bounds = array<i64: 32, 8>}, {pipeline_mode = #tpu.pipeline_mode<synchronous>, transform_indices = @transform_6, window_bounds = array<i64: 1, 8>}, {transform_indices = @transform_7, window_bounds = array<i64: 1024, 8>}]} {
    %c0 = arith.constant 0 : index
    %c0_0 = arith.constant 0 : index
    %0 = vector.load %arg1[%c0, %c0_0] : memref<1024x16xf32, #tpu.memory_space<vmem>>, vector<1024x16xf32>
    %c0_1 = arith.constant 0 : index
    %c0_2 = arith.constant 0 : index
    %1 = vector.load %arg2[%c0_1, %c0_2] : memref<16x32xf32, #tpu.memory_space<vmem>>, vector<16x32xf32>
    %cst = arith.constant dense<0.000000e+00> : vector<1024x32xf32>
    %2 = tpu.matmul %0, %1, %cst {dimension_numbers = #tpu.dot_dimension_numbers<[1], [0], [0], [1], [0, 0, 1, 1], [], []>} : vector<1024x16xf32>, vector<16x32xf32>, vector<1024x32xf32> -> vector<1024x32xf32>
    %c0_3 = arith.constant 0 : index
    %c0_4 = arith.constant 0 : index
    %3 = vector.load %arg3[%c0_3, %c0_4] : memref<1x32xf32, #tpu.memory_space<vmem>>, vector<1x32xf32>
    %4 = vector.broadcast %3 : vector<1x32xf32> to vector<1024x32xf32>
    %5 = arith.addf %2, %4 : vector<1024x32xf32>
    %cst_5 = arith.constant 0.000000e+00 : f32
    %6 = vector.broadcast %cst_5 : f32 to vector<1024x32xf32>
    %7 = arith.maximumf %5, %6 : vector<1024x32xf32>
    %c0_6 = arith.constant 0 : index
    %c0_7 = arith.constant 0 : index
    %8 = vector.load %arg4[%c0_6, %c0_7] : memref<32x32xf32, #tpu.memory_space<vmem>>, vector<32x32xf32>
    %cst_8 = arith.constant dense<0.000000e+00> : vector<1024x32xf32>
    %9 = tpu.matmul %7, %8, %cst_8 {dimension_numbers = #tpu.dot_dimension_numbers<[1], [0], [0], [1], [0, 0, 1, 1], [], []>} : vector<1024x32xf32>, vector<32x32xf32>, vector<1024x32xf32> -> vector<1024x32xf32>
    %c0_9 = arith.constant 0 : index
    %c0_10 = arith.constant 0 : index
    %10 = vector.load %arg5[%c0_9, %c0_10] : memref<1x32xf32, #tpu.memory_space<vmem>>, vector<1x32xf32>
    %11 = vector.broadcast %10 : vector<1x32xf32> to vector<1024x32xf32>
    %12 = arith.addf %9, %11 : vector<1024x32xf32>
    %cst_11 = arith.constant 0.000000e+00 : f32
    %13 = vector.broadcast %cst_11 : f32 to vector<1024x32xf32>
    %14 = arith.maximumf %12, %13 : vector<1024x32xf32>
    %c0_12 = arith.constant 0 : index
    %c0_13 = arith.constant 0 : index
    %15 = vector.load %arg6[%c0_12, %c0_13] : memref<32x8xf32, #tpu.memory_space<vmem>>, vector<32x8xf32>
    %cst_14 = arith.constant dense<0.000000e+00> : vector<1024x8xf32>
    %16 = tpu.matmul %14, %15, %cst_14 {dimension_numbers = #tpu.dot_dimension_numbers<[1], [0], [0], [1], [0, 0, 1, 1], [], []>} : vector<1024x32xf32>, vector<32x8xf32>, vector<1024x8xf32> -> vector<1024x8xf32>
    %c0_15 = arith.constant 0 : index
    %c0_16 = arith.constant 0 : index
    %17 = vector.load %arg7[%c0_15, %c0_16] : memref<1x8xf32, #tpu.memory_space<vmem>>, vector<1x8xf32>
    %18 = vector.broadcast %17 : vector<1x8xf32> to vector<1024x8xf32>
    %19 = arith.addf %16, %18 : vector<1024x8xf32>
    %20 = math.tanh %19 : vector<1024x8xf32>
    %c0_17 = arith.constant 0 : index
    %c0_18 = arith.constant 0 : index
    %21 = vector.load %arg8[%c0_17, %c0_18] : memref<1024x8xf32, #tpu.memory_space<vmem>>, vector<1024x8xf32>
    tpu.vector_store %arg8[%c0_17, %c0_18], %20 {strides = array<i32>} : memref<1024x8xf32, #tpu.memory_space<vmem>>, vector<1024x8xf32>,
    return
  }
  func.func @transform_0(%arg0: i32) -> (i32, i32) {
    %c0_i32 = arith.constant 0 : i32
    %c0_i32_0 = arith.constant 0 : i32
    return %arg0, %c0_i32 : i32, i32
  }
  func.func @transform_1(%arg0: i32) -> (i32, i32) {
    %c0_i32 = arith.constant 0 : i32
    %c0_i32_0 = arith.constant 0 : i32
    %c0_i32_1 = arith.constant 0 : i32
    return %c0_i32, %c0_i32_0 : i32, i32
  }
  func.func @transform_2(%arg0: i32) -> (i32, i32) {
    %c0_i32 = arith.constant 0 : i32
    %c0_i32_0 = arith.constant 0 : i32
    %c0_i32_1 = arith.constant 0 : i32
    return %c0_i32, %c0_i32_0 : i32, i32
  }
  func.func @transform_3(%arg0: i32) -> (i32, i32) {
    %c0_i32 = arith.constant 0 : i32
    %c0_i32_0 = arith.constant 0 : i32
    %c0_i32_1 = arith.constant 0 : i32
    return %c0_i32, %c0_i32_0 : i32, i32
  }
  func.func @transform_4(%arg0: i32) -> (i32, i32) {
    %c0_i32 = arith.constant 0 : i32
    %c0_i32_0 = arith.constant 0 : i32
    %c0_i32_1 = arith.constant 0 : i32
    return %c0_i32, %c0_i32_0 : i32, i32
  }
  func.func @transform_5(%arg0: i32) -> (i32, i32) {
    %c0_i32 = arith.constant 0 : i32
    %c0_i32_0 = arith.constant 0 : i32
    %c0_i32_1 = arith.constant 0 : i32
    return %c0_i32, %c0_i32_0 : i32, i32
  }
  func.func @transform_6(%arg0: i32) -> (i32, i32) {
    %c0_i32 = arith.constant 0 : i32
    %c0_i32_0 = arith.constant 0 : i32
    %c0_i32_1 = arith.constant 0 : i32
    return %c0_i32, %c0_i32_0 : i32, i32
  }
  func.func @transform_7(%arg0: i32) -> (i32, i32) {
    %c0_i32 = arith.constant 0 : i32
    %c0_i32_0 = arith.constant 0 : i32
    return %arg0, %c0_i32 : i32, i32
  }
}

</mosaic_0001>

<llo_original>
// kernel: tpu_custom_call.1
$region0: #{tpu_custom_call.1}
  #allocation0 [shape = 'u32[]', space=smem, size = 0x4, offset = 0x4, fixed_abs, tag = 'smem constant byte address 0x4 - core index']
  #allocation1 [shape = 'u32[72,128]{1,0:T(1,128)}', space=vmem, size = 0x9000, scoped, tag = 'internal scratch']
  %s0 = inlined_call_operand.vmem [shape: f32[2048,16], index: 0, kind: input, shape index: {}]
  %s1 = inlined_call_operand.vmem [shape: f32[16,32], index: 1, kind: input, shape index: {}]
  %s2 = inlined_call_operand.vmem [shape: f32[1,32], index: 2, kind: input, shape index: {}]
  %s3 = inlined_call_operand.vmem [shape: f32[32,32], index: 3, kind: input, shape index: {}]
  %s4 = inlined_call_operand.vmem [shape: f32[1,32], index: 4, kind: input, shape index: {}]
  %s5 = inlined_call_operand.vmem [shape: f32[32,8], index: 5, kind: input, shape index: {}]
  %s6 = inlined_call_operand.vmem [shape: f32[1,8], index: 6, kind: input, shape index: {}]
  %s7 = inlined_call_operand.vmem [shape: f32[2048,8], index: 7, kind: output, shape index: {}]
  %s8 = sld [smem:[#allocation0]]
  $region61: #{tpu_custom_call.1} parent=0
    _
  %s10 = ssub.s32 1, %s8
  %s11 = scalar_select 0, %s10, %s8
  loop: start=0, step=1, limit=4
  $region2: #{tpu_custom_call.1} parent=0 // loop_pre_header
    _
  $region3: #{tpu_custom_call.1} parent=0 // loop_header
    %s13 = sphi 0, %s17
    %p14 = scmp.ge.s32.totalorder %s13, 4
    %s23 = sphi 0, %s25
    %s26 = sphi 0, %s23
    %s27 = sphi 0, %s26
    %s43 = sphi 0, %s27
    %s47 = sphi 0, %s47
    %s49 = sphi 0, %s47
    %s50 = sphi 0, %s49
    %s64 = sphi 0, %s50
    %s68 = sphi 0, %s68
    %s70 = sphi 0, %s68
    %s71 = sphi 0, %s70
    %s85 = sphi 0, %s71
    %s89 = sphi 0, %s89
    %s91 = sphi 0, %s89
    %s92 = sphi 0, %s91
    %s106 = sphi 0, %s92
    %s110 = sphi 0, %s110
    %s112 = sphi 0, %s110
    %s113 = sphi 0, %s112
    %s127 = sphi 0, %s113
    %s131 = sphi 0, %s131
    %s133 = sphi 0, %s131
    %s134 = sphi 0, %s133
    %s148 = sphi 0, %s134
    %s152 = sphi 0, %s152
    %s154 = sphi 0, %s152
    %s155 = sphi 0, %s154
    %s169 = sphi 0, %s155
    %s175 = sphi 0, %s177
    %s178 = sphi 0, %s175
    %s179 = sphi 0, %s178
    %s195 = sphi 0, %s179
  $region4: #{tpu_custom_call.1} parent=0 // loop_header_branch
    %16 = sbr.rel (%p14) target = $region8
  $region5: #{tpu_custom_call.1} parent=0 // loop_body
    %s18 = ssub.s32 %s13, 1
    %s19 = ssub.s32 %s13, 2
    %s20 = sadd.s32 %s13, 1
    %s21 = ssub.s32 %s13, %s20
    %p22 = scmp.eq.s32.totalorder %s21, 0
    %s24 = sadd.s32 %s23, 1
    %s25 = scalar_select %p22, %s23, %s24
    %p28 = pneg %p22
    %p29 = scmp.eq.s32.totalorder %s13, 1
    %p30 = por %p28, %p29
    %p31 = scmp.ne.s32.totalorder %s23, %s26
    %p32 = scmp.eq.s32.totalorder %s13, 0
    %p33 = por %p31, %p32
    %p34 = scmp.ne.s32.totalorder %s23, %s26
    %p35 = scmp.eq.s32.totalorder %s18, 1
    %p36 = por %p34, %p35
    %p37 = scmp.ne.s32.totalorder %s26, %s27
    %p38 = scmp.eq.s32.totalorder %s18, 0
    %p39 = por %p37, %p38
    %p40 = scmp.ne.s32.totalorder %s26, %s27
    %p41 = scmp.eq.s32.totalorder %s19, 1
    %p42 = por %p40, %p41
    %p44 = scmp.ne.s32.totalorder %s27, %s43
    %p45 = scmp.eq.s32.totalorder %s19, 0
    %p46 = por %p44, %p45
    %s48 = sadd.s32 %s47, 1
    %p51 = scmp.eq.s32.totalorder %s13, 1
    %p52 = scmp.ne.s32.totalorder %s47, %s49
    %p53 = scmp.eq.s32.totalorder %s13, 0
    %p54 = por %p52, %p53
    %p55 = scmp.ne.s32.totalorder %s47, %s49
    %p56 = scmp.eq.s32.totalorder %s18, 1
    %p57 = por %p55, %p56
    %p58 = scmp.ne.s32.totalorder %s49, %s50
    %p59 = scmp.eq.s32.totalorder %s18, 0
    %p60 = por %p58, %p59
    %p61 = scmp.ne.s32.totalorder %s49, %s50
    %p62 = scmp.eq.s32.totalorder %s19, 1
    %p63 = por %p61, %p62
    %p65 = scmp.ne.s32.totalorder %s50, %s64
    %p66 = scmp.eq.s32.totalorder %s19, 0
    %p67 = por %p65, %p66
    %s69 = sadd.s32 %s68, 1
    %p72 = scmp.eq.s32.totalorder %s13, 1
    %p73 = scmp.ne.s32.totalorder %s68, %s70
    %p74 = scmp.eq.s32.totalorder %s13, 0
    %p75 = por %p73, %p74
    %p76 = scmp.ne.s32.totalorder %s68, %s70
    %p77 = scmp.eq.s32.totalorder %s18, 1
    %p78 = por %p76, %p77
    %p79 = scmp.ne.s32.totalorder %s70, %s71
    %p80 = scmp.eq.s32.totalorder %s18, 0
    %p81 = por %p79, %p80
    %p82 = scmp.ne.s32.totalorder %s70, %s71
    %p83 = scmp.eq.s32.totalorder %s19, 1
    %p84 = por %p82, %p83
    %p86 = scmp.ne.s32.totalorder %s71, %s85
    %p87 = scmp.eq.s32.totalorder %s19, 0
    %p88 = por %p86, %p87
    %s90 = sadd.s32 %s89, 1
    %p93 = scmp.eq.s32.totalorder %s13, 1
    %p94 = scmp.ne.s32.totalorder %s89, %s91
    %p95 = scmp.eq.s32.totalorder %s13, 0
    %p96 = por %p94, %p95
    %p97 = scmp.ne.s32.totalorder %s89, %s91
    %p98 = scmp.eq.s32.totalorder %s18, 1
    %p99 = por %p97, %p98
    %p100 = scmp.ne.s32.totalorder %s91, %s92
    %p101 = scmp.eq.s32.totalorder %s18, 0
    %p102 = por %p100, %p101
    %p103 = scmp.ne.s32.totalorder %s91, %s92
    %p104 = scmp.eq.s32.totalorder %s19, 1
    %p105 = por %p103, %p104
    %p107 = scmp.ne.s32.totalorder %s92, %s106
    %p108 = scmp.eq.s32.totalorder %s19, 0
    %p109 = por %p107, %p108
    %s111 = sadd.s32 %s110, 1
    %p114 = scmp.eq.s32.totalorder %s13, 1
    %p115 = scmp.ne.s32.totalorder %s110, %s112
    %p116 = scmp.eq.s32.totalorder %s13, 0
    %p117 = por %p115, %p116
    %p118 = scmp.ne.s32.totalorder %s110, %s112
    %p119 = scmp.eq.s32.totalorder %s18, 1
    %p120 = por %p118, %p119
    %p121 = scmp.ne.s32.totalorder %s112, %s113
    %p122 = scmp.eq.s32.totalorder %s18, 0
    %p123 = por %p121, %p122
    %p124 = scmp.ne.s32.totalorder %s112, %s113
    %p125 = scmp.eq.s32.totalorder %s19, 1
    %p126 = por %p124, %p125
    %p128 = scmp.ne.s32.totalorder %s113, %s127
    %p129 = scmp.eq.s32.totalorder %s19, 0
    %p130 = por %p128, %p129
    %s132 = sadd.s32 %s131, 1
    %p135 = scmp.eq.s32.totalorder %s13, 1
    %p136 = scmp.ne.s32.totalorder %s131, %s133
    %p137 = scmp.eq.s32.totalorder %s13, 0
    %p138 = por %p136, %p137
    %p139 = scmp.ne.s32.totalorder %s131, %s133
    %p140 = scmp.eq.s32.totalorder %s18, 1
    %p141 = por %p139, %p140
    %p142 = scmp.ne.s32.totalorder %s133, %s134
    %p143 = scmp.eq.s32.totalorder %s18, 0
    %p144 = por %p142, %p143
    %p145 = scmp.ne.s32.totalorder %s133, %s134
    %p146 = scmp.eq.s32.totalorder %s19, 1
    %p147 = por %p145, %p146
    %p149 = scmp.ne.s32.totalorder %s134, %s148
    %p150 = scmp.eq.s32.totalorder %s19, 0
    %p151 = por %p149, %p150
    %s153 = sadd.s32 %s152, 1
    %p156 = scmp.eq.s32.totalorder %s13, 1
    %p157 = scmp.ne.s32.totalorder %s152, %s154
    %p158 = scmp.eq.s32.totalorder %s13, 0
    %p159 = por %p157, %p158
    %p160 = scmp.ne.s32.totalorder %s152, %s154
    %p161 = scmp.eq.s32.totalorder %s18, 1
    %p162 = por %p160, %p161
    %p163 = scmp.ne.s32.totalorder %s154, %s155
    %p164 = scmp.eq.s32.totalorder %s18, 0
    %p165 = por %p163, %p164
    %p166 = scmp.ne.s32.totalorder %s154, %s155
    %p167 = scmp.eq.s32.totalorder %s19, 1
    %p168 = por %p166, %p167
    %p170 = scmp.ne.s32.totalorder %s155, %s169
    %p171 = scmp.eq.s32.totalorder %s19, 0
    %p172 = por %p170, %p171
    %s173 = ssub.s32 %s13, %s20
    %p174 = scmp.eq.s32.totalorder %s173, 0
    %s176 = sadd.s32 %s175, 1
    %s177 = scalar_select %p174, %s175, %s176
    %p180 = pneg %p174
    %p181 = scmp.eq.s32.totalorder %s13, 1
    %p182 = por %p180, %p181
    %p183 = scmp.ne.s32.totalorder %s175, %s178
    %p184 = scmp.eq.s32.totalorder %s13, 0
    %p185 = por %p183, %p184
    %p186 = scmp.ne.s32.totalorder %s175, %s178
    %p187 = scmp.eq.s32.totalorder %s18, 1
    %p188 = por %p186, %p187
    %p189 = scmp.ne.s32.totalorder %s178, %s179
    %p190 = scmp.eq.s32.totalorder %s18, 0
    %p191 = por %p189, %p190
    %p192 = scmp.ne.s32.totalorder %s178, %s179
    %p193 = scmp.eq.s32.totalorder %s19, 1
    %p194 = por %p192, %p193
    %p196 = scmp.ne.s32.totalorder %s179, %s195
    %p197 = scmp.eq.s32.totalorder %s19, 0
    %p198 = por %p196, %p197
    %p199 = scmp.le.s32.totalorder 1, %s13
    %p200 = scmp.lt.s32.totalorder %s13, 3
    %p201 = pnand %p199, %p200
    %p202 = pneg %p201
    // Predicated region
    $region9: #{tpu_custom_call.1} parent=5 // pred_check
      _
    $region10: #{tpu_custom_call.1} parent=5 // pred_check_branch
      %204 = sbr.rel (%p201) target = $region12
    $region11: #{tpu_custom_call.1} parent=5 // pred_region
      %s205 = ssub.s32 %s13, 1
      // Predicated region
      $region13: #{tpu_custom_call.1} parent=11 // pred_check
        %p206 = pneg %p60
      $region14: #{tpu_custom_call.1} parent=11 // pred_check_branch
        %208 = sbr.rel (%p206) target = $region16
      $region15: #{tpu_custom_call.1} parent=11 // pred_region
        _
      $region16: #{tpu_custom_call.1} parent=11 // pred_fallthru
        _
      // Predicated region
      $region17: #{tpu_custom_call.1} parent=11 // pred_check
        %p209 = pneg %p81
      $region18: #{tpu_custom_call.1} parent=11 // pred_check_branch
        %211 = sbr.rel (%p209) target = $region20
      $region19: #{tpu_custom_call.1} parent=11 // pred_region
        _
      $region20: #{tpu_custom_call.1} parent=11 // pred_fallthru
        _
      // Predicated region
      $region21: #{tpu_custom_call.1} parent=11 // pred_check
        %p212 = pneg %p102
      $region22: #{tpu_custom_call.1} parent=11 // pred_check_branch
        %214 = sbr.rel (%p212) target = $region24
      $region23: #{tpu_custom_call.1} parent=11 // pred_region
        _
      $region24: #{tpu_custom_call.1} parent=11 // pred_fallthru
        _
      // Predicated region
      $region25: #{tpu_custom_call.1} parent=11 // pred_check
        %p215 = pneg %p123
      $region26: #{tpu_custom_call.1} parent=11 // pred_check_branch
        %217 = sbr.rel (%p215) target = $region28
      $region27: #{tpu_custom_call.1} parent=11 // pred_region
        _
      $region28: #{tpu_custom_call.1} parent=11 // pred_fallthru
        _
      // Predicated region
      $region29: #{tpu_custom_call.1} parent=11 // pred_check
        %p218 = pneg %p144
      $region30: #{tpu_custom_call.1} parent=11 // pred_check_branch
        %220 = sbr.rel (%p218) target = $region32
      $region31: #{tpu_custom_call.1} parent=11 // pred_region
        _
      $region32: #{tpu_custom_call.1} parent=11 // pred_fallthru
        _
      // Predicated region
      $region33: #{tpu_custom_call.1} parent=11 // pred_check
        %p221 = pneg %p165
      $region34: #{tpu_custom_call.1} parent=11 // pred_check_branch
        %223 = sbr.rel (%p221) target = $region36
      $region35: #{tpu_custom_call.1} parent=11 // pred_region
        _
      $region36: #{tpu_custom_call.1} parent=11 // pred_fallthru
        _
    $region12: #{tpu_custom_call.1} parent=5 // pred_fallthru
      _
    %p224 = scmp.lt.s32.totalorder %s13, 2
    // Predicated region
    $region37: #{tpu_custom_call.1} parent=5 // pred_check
      %p225 = pneg %p224
    $region38: #{tpu_custom_call.1} parent=5 // pred_check_branch
      %227 = sbr.rel (%p225) target = $region40
    $region39: #{tpu_custom_call.1} parent=5 // pred_region
      // Predicated region
      $region41: #{tpu_custom_call.1} parent=39 // pred_check
        %p228 = pneg %p33
      $region42: #{tpu_custom_call.1} parent=39 // pred_check_branch
        %230 = sbr.rel (%p228) target = $region44
      $region43: #{tpu_custom_call.1} parent=39 // pred_region
        %s231 = smul.u32 128, %s13
        %p232 = scmp.lt.s32.totalorder %s231, 255
        %s233 = scalar_select %p232, %s231, 255
        %s234 = smul.addr %s233, 8
        %s235 = scalar_lea.vmem %s0, %s234
        %s236 = smul.u32 128, %s13
      $region44: #{tpu_custom_call.1} parent=39 // pred_fallthru
        _
    $region40: #{tpu_custom_call.1} parent=5 // pred_fallthru
      _
    %p237 = scmp.le.s32.totalorder 1, %s13
    %p238 = scmp.lt.s32.totalorder %s13, 3
    %p239 = pnand %p237, %p238
    %p240 = pneg %p239
    // Predicated region
    $region45: #{tpu_custom_call.1} parent=5 // pred_check
      _
    $region46: #{tpu_custom_call.1} parent=5 // pred_check_branch
      %242 = sbr.rel (%p239) target = $region48
    $region47: #{tpu_custom_call.1} parent=5 // pred_region
      %s243 = ssub.s32 %s13, 1
      %s244 = smul.u32 128, %s18
      %p245 = scmp.lt.s32.totalorder %s244, 255
      %s246 = scalar_select %p245, %s244, 255
      %s247 = smul.addr %s246, 8
      %s248 = scalar_lea.vmem %s0, %s247
      %p249 = pneg %p39
      %p250 = pneg %p36
      %p251 = pneg %p60
      %p252 = pneg %p57
      %p253 = pneg %p81
      %p254 = pneg %p78
      %p255 = pneg %p102
      %p256 = pneg %p99
      %p257 = pneg %p123
      %p258 = pneg %p120
      %p259 = pneg %p144
      %p260 = pneg %p141
      %p261 = pneg %p165
      %p262 = pneg %p162
      %p263 = pneg %p191
      %p264 = pneg %p188
      %s265 = smul.u32 128, %s18
      %p266 = scmp.lt.s32.totalorder %s265, 255
      %s267 = scalar_select %p266, %s265, 255
      %s268 = smul.addr %s267, 8
      %s269 = scalar_lea.vmem %s7, %s268
      %s270 = smul.u32 128, %s18
      %p271 = scmp.lt.s32.totalorder %s270, 255
      %s272 = scalar_select %p271, %s270, 255
      %s273 = smul.addr %s272, 8
      %s274 = scalar_lea.vmem %s0, %s273
      %s275 = smul.u32 128, %s18
      %s276 = smul.u32 128, %s18
      %p277 = scmp.lt.s32.totalorder %s276, 255
      %s278 = scalar_select %p277, %s276, 255
      %s279 = smul.addr %s278, 8
      %s280 = scalar_lea.vmem %s7, %s279
      %s281 = smul.u32 128, %s18
      %v282 = vld [vmem:[%s274] sm:$0xff]
      %v283 = vld [vmem:[%s274 + $0x8] sm:$0xff]
      %v284 = vld [vmem:[%s274 + $0x10] sm:$0xff]
      %v285 = vld [vmem:[%s274 + $0x18] sm:$0xff]
      %v286 = vld [vmem:[%s274 + $0x20] sm:$0xff]
      %v287 = vld [vmem:[%s274 + $0x28] sm:$0xff]
      %v288 = vld [vmem:[%s274 + $0x30] sm:$0xff]
      %v289 = vld [vmem:[%s274 + $0x38] sm:$0xff]
      %v290 = vld [vmem:[%s274 + $0x40] sm:$0xff]
      %v291 = vld [vmem:[%s274 + $0x48] sm:$0xff]
      %v292 = vld [vmem:[%s274 + $0x50] sm:$0xff]
      %v293 = vld [vmem:[%s274 + $0x58] sm:$0xff]
      %v294 = vld [vmem:[%s274 + $0x60] sm:$0xff]
      %v295 = vld [vmem:[%s274 + $0x68] sm:$0xff]
      %v296 = vld [vmem:[%s274 + $0x70] sm:$0xff]
      %v297 = vld [vmem:[%s274 + $0x78] sm:$0xff]
      %v298 = vld [vmem:[%s274 + $0x80] sm:$0xff]
      %v299 = vld [vmem:[%s274 + $0x88] sm:$0xff]
      %v300 = vld [vmem:[%s274 + $0x90] sm:$0xff]
      %v301 = vld [vmem:[%s274 + $0x98] sm:$0xff]
      %v302 = vld [vmem:[%s274 + $0xa0] sm:$0xff]
      %v303 = vld [vmem:[%s274 + $0xa8] sm:$0xff]
      %v304 = vld [vmem:[%s274 + $0xb0] sm:$0xff]
      %v305 = vld [vmem:[%s274 + $0xb8] sm:$0xff]
      %v306 = vld [vmem:[%s274 + $0xc0] sm:$0xff]
      %v307 = vld [vmem:[%s274 + $0xc8] sm:$0xff]
      %v308 = vld [vmem:[%s274 + $0xd0] sm:$0xff]
      %v309 = vld [vmem:[%s274 + $0xd8] sm:$0xff]
      %v310 = vld [vmem:[%s274 + $0xe0] sm:$0xff]
      %v311 = vld [vmem:[%s274 + $0xe8] sm:$0xff]
      %v312 = vld [vmem:[%s274 + $0xf0] sm:$0xff]
      %v313 = vld [vmem:[%s274 + $0xf8] sm:$0xff]
      %v314 = vld [vmem:[%s274 + $0x100] sm:$0xff]
      %v315 = vld [vmem:[%s274 + $0x108] sm:$0xff]
      %v316 = vld [vmem:[%s274 + $0x110] sm:$0xff]
      %v317 = vld [vmem:[%s274 + $0x118] sm:$0xff]
      %v318 = vld [vmem:[%s274 + $0x120] sm:$0xff]
      %v319 = vld [vmem:[%s274 + $0x128] sm:$0xff]
      %v320 = vld [vmem:[%s274 + $0x130] sm:$0xff]
      %v321 = vld [vmem:[%s274 + $0x138] sm:$0xff]
      %v322 = vld [vmem:[%s274 + $0x140] sm:$0xff]
      %v323 = vld [vmem:[%s274 + $0x148] sm:$0xff]
      %v324 = vld [vmem:[%s274 + $0x150] sm:$0xff]
      %v325 = vld [vmem:[%s274 + $0x158] sm:$0xff]
      %v326 = vld [vmem:[%s274 + $0x160] sm:$0xff]
      %v327 = vld [vmem:[%s274 + $0x168] sm:$0xff]
      %v328 = vld [vmem:[%s274 + $0x170] sm:$0xff]
      %v329 = vld [vmem:[%s274 + $0x178] sm:$0xff]
      %v330 = vld [vmem:[%s274 + $0x180] sm:$0xff]
      %v331 = vld [vmem:[%s274 + $0x188] sm:$0xff]
      %v332 = vld [vmem:[%s274 + $0x190] sm:$0xff]
      %v333 = vld [vmem:[%s274 + $0x198] sm:$0xff]
      %v334 = vld [vmem:[%s274 + $0x1a0] sm:$0xff]
      %v335 = vld [vmem:[%s274 + $0x1a8] sm:$0xff]
      %v336 = vld [vmem:[%s274 + $0x1b0] sm:$0xff]
      %v337 = vld [vmem:[%s274 + $0x1b8] sm:$0xff]
      %v338 = vld [vmem:[%s274 + $0x1c0] sm:$0xff]
      %v339 = vld [vmem:[%s274 + $0x1c8] sm:$0xff]
      %v340 = vld [vmem:[%s274 + $0x1d0] sm:$0xff]
      %v341 = vld [vmem:[%s274 + $0x1d8] sm:$0xff]
      %v342 = vld [vmem:[%s274 + $0x1e0] sm:$0xff]
      %v343 = vld [vmem:[%s274 + $0x1e8] sm:$0xff]
      %v344 = vld [vmem:[%s274 + $0x1f0] sm:$0xff]
      %v345 = vld [vmem:[%s274 + $0x1f8] sm:$0xff]
      %v346 = vld [vmem:[%s274 + $0x200] sm:$0xff]
      %v347 = vld [vmem:[%s274 + $0x208] sm:$0xff]
      %v348 = vld [vmem:[%s274 + $0x210] sm:$0xff]
      %v349 = vld [vmem:[%s274 + $0x218] sm:$0xff]
      %v350 = vld [vmem:[%s274 + $0x220] sm:$0xff]
      %v351 = vld [vmem:[%s274 + $0x228] sm:$0xff]
      %v352 = vld [vmem:[%s274 + $0x230] sm:$0xff]
      %v353 = vld [vmem:[%s274 + $0x238] sm:$0xff]
      %v354 = vld [vmem:[%s274 + $0x240] sm:$0xff]
      %v355 = vld [vmem:[%s274 + $0x248] sm:$0xff]
      %v356 = vld [vmem:[%s274 + $0x250] sm:$0xff]
      %v357 = vld [vmem:[%s274 + $0x258] sm:$0xff]
      %v358 = vld [vmem:[%s274 + $0x260] sm:$0xff]
      %v359 = vld [vmem:[%s274 + $0x268] sm:$0xff]
      %v360 = vld [vmem:[%s274 + $0x270] sm:$0xff]
      %v361 = vld [vmem:[%s274 + $0x278] sm:$0xff]
      %v362 = vld [vmem:[%s274 + $0x280] sm:$0xff]
      %v363 = vld [vmem:[%s274 + $0x288] sm:$0xff]
      %v364 = vld [vmem:[%s274 + $0x290] sm:$0xff]
      %v365 = vld [vmem:[%s274 + $0x298] sm:$0xff]
      %v366 = vld [vmem:[%s274 + $0x2a0] sm:$0xff]
      %v367 = vld [vmem:[%s274 + $0x2a8] sm:$0xff]
      %v368 = vld [vmem:[%s274 + $0x2b0] sm:$0xff]
      %v369 = vld [vmem:[%s274 + $0x2b8] sm:$0xff]
      %v370 = vld [vmem:[%s274 + $0x2c0] sm:$0xff]
      %v371 = vld [vmem:[%s274 + $0x2c8] sm:$0xff]
      %v372 = vld [vmem:[%s274 + $0x2d0] sm:$0xff]
      %v373 = vld [vmem:[%s274 + $0x2d8] sm:$0xff]
      %v374 = vld [vmem:[%s274 + $0x2e0] sm:$0xff]
      %v375 = vld [vmem:[%s274 + $0x2e8] sm:$0xff]
      %v376 = vld [vmem:[%s274 + $0x2f0] sm:$0xff]
      %v377 = vld [vmem:[%s274 + $0x2f8] sm:$0xff]
      %v378 = vld [vmem:[%s274 + $0x300] sm:$0xff]
      %v379 = vld [vmem:[%s274 + $0x308] sm:$0xff]
      %v380 = vld [vmem:[%s274 + $0x310] sm:$0xff]
      %v381 = vld [vmem:[%s274 + $0x318] sm:$0xff]
      %v382 = vld [vmem:[%s274 + $0x320] sm:$0xff]
      %v383 = vld [vmem:[%s274 + $0x328] sm:$0xff]
      %v384 = vld [vmem:[%s274 + $0x330] sm:$0xff]
      %v385 = vld [vmem:[%s274 + $0x338] sm:$0xff]
      %v386 = vld [vmem:[%s274 + $0x340] sm:$0xff]
      %v387 = vld [vmem:[%s274 + $0x348] sm:$0xff]
      %v388 = vld [vmem:[%s274 + $0x350] sm:$0xff]
      %v389 = vld [vmem:[%s274 + $0x358] sm:$0xff]
      %v390 = vld [vmem:[%s274 + $0x360] sm:$0xff]
      %v391 = vld [vmem:[%s274 + $0x368] sm:$0xff]
      %v392 = vld [vmem:[%s274 + $0x370] sm:$0xff]
      %v393 = vld [vmem:[%s274 + $0x378] sm:$0xff]
      %v394 = vld [vmem:[%s274 + $0x380] sm:$0xff]
      %v395 = vld [vmem:[%s274 + $0x388] sm:$0xff]
      %v396 = vld [vmem:[%s274 + $0x390] sm:$0xff]
      %v397 = vld [vmem:[%s274 + $0x398] sm:$0xff]
      %v398 = vld [vmem:[%s274 + $0x3a0] sm:$0xff]
      %v399 = vld [vmem:[%s274 + $0x3a8] sm:$0xff]
      %v400 = vld [vmem:[%s274 + $0x3b0] sm:$0xff]
      %v401 = vld [vmem:[%s274 + $0x3b8] sm:$0xff]
      %v402 = vld [vmem:[%s274 + $0x3c0] sm:$0xff]
      %v403 = vld [vmem:[%s274 + $0x3c8] sm:$0xff]
      %v404 = vld [vmem:[%s274 + $0x3d0] sm:$0xff]
      %v405 = vld [vmem:[%s274 + $0x3d8] sm:$0xff]
      %v406 = vld [vmem:[%s274 + $0x3e0] sm:$0xff]
      %v407 = vld [vmem:[%s274 + $0x3e8] sm:$0xff]
      %v408 = vld [vmem:[%s274 + $0x3f0] sm:$0xff]
      %v409 = vld [vmem:[%s274 + $0x3f8] sm:$0xff]
      %v410 = vld [vmem:[%s1] sm:$0xff]
      %v411 = vld [vmem:[%s1 + $0x8] sm:$0xff]
      %v412 = vld [vmem:[%s2] sm:$0x1]
      %v414 = vperm.slane %v412, 0
      %vm416 = vcmask 130048
      %v418 = vsel %vm416, %v282, 0
      %v421 = vsel %vm416, %v283, 0
      %v424 = vsel %vm416, %v284, 0
      %v427 = vsel %vm416, %v285, 0
      %v430 = vsel %vm416, %v286, 0
      %v433 = vsel %vm416, %v287, 0
      %v436 = vsel %vm416, %v288, 0
      %v439 = vsel %vm416, %v289, 0
      %v442 = vsel %vm416, %v290, 0
      %v445 = vsel %vm416, %v291, 0
      %v448 = vsel %vm416, %v292, 0
      %v451 = vsel %vm416, %v293, 0
      %v454 = vsel %vm416, %v294, 0
      %v457 = vsel %vm416, %v295, 0
      %v460 = vsel %vm416, %v296, 0
      %v463 = vsel %vm416, %v297, 0
      %v466 = vsel %vm416, %v298, 0
      %v469 = vsel %vm416, %v299, 0
      %v472 = vsel %vm416, %v300, 0
      %v475 = vsel %vm416, %v301, 0
      %v478 = vsel %vm416, %v302, 0
      %v481 = vsel %vm416, %v303, 0
      %v484 = vsel %vm416, %v304, 0
      %v487 = vsel %vm416, %v305, 0
      %v490 = vsel %vm416, %v306, 0
      %v493 = vsel %vm416, %v307, 0
      %v496 = vsel %vm416, %v308, 0
      %v499 = vsel %vm416, %v309, 0
      %v502 = vsel %vm416, %v310, 0
      %v505 = vsel %vm416, %v311, 0
      %v508 = vsel %vm416, %v312, 0
      %v511 = vsel %vm416, %v313, 0
      %v514 = vsel %vm416, %v314, 0
      %v517 = vsel %vm416, %v315, 0
      %v520 = vsel %vm416, %v316, 0
      %v523 = vsel %vm416, %v317, 0
      %v526 = vsel %vm416, %v318, 0
      %v529 = vsel %vm416, %v319, 0
      %v532 = vsel %vm416, %v320, 0
      %v535 = vsel %vm416, %v321, 0
      %v538 = vsel %vm416, %v322, 0
      %v541 = vsel %vm416, %v323, 0
      %v544 = vsel %vm416, %v324, 0
      %v547 = vsel %vm416, %v325, 0
      %v550 = vsel %vm416, %v326, 0
      %v553 = vsel %vm416, %v327, 0
      %v556 = vsel %vm416, %v328, 0
      %v559 = vsel %vm416, %v329, 0
      %v562 = vsel %vm416, %v330, 0
      %v565 = vsel %vm416, %v331, 0
      %v568 = vsel %vm416, %v332, 0
      %v571 = vsel %vm416, %v333, 0
      %v574 = vsel %vm416, %v334, 0
      %v577 = vsel %vm416, %v335, 0
      %v580 = vsel %vm416, %v336, 0
      %v583 = vsel %vm416, %v337, 0
      %v586 = vsel %vm416, %v338, 0
      %v589 = vsel %vm416, %v339, 0
      %v592 = vsel %vm416, %v340, 0
      %v595 = vsel %vm416, %v341, 0
      %v598 = vsel %vm416, %v342, 0
      %v601 = vsel %vm416, %v343, 0
      %v604 = vsel %vm416, %v344, 0
      %v607 = vsel %vm416, %v345, 0
      %v610 = vsel %vm416, %v346, 0
      %v613 = vsel %vm416, %v347, 0
      %v616 = vsel %vm416, %v348, 0
      %v619 = vsel %vm416, %v349, 0
      %v622 = vsel %vm416, %v350, 0
      %v625 = vsel %vm416, %v351, 0
      %v628 = vsel %vm416, %v352, 0
      %v631 = vsel %vm416, %v353, 0
      %v634 = vsel %vm416, %v354, 0
      %v637 = vsel %vm416, %v355, 0
      %v640 = vsel %vm416, %v356, 0
      %v643 = vsel %vm416, %v357, 0
      %v646 = vsel %vm416, %v358, 0
      %v649 = vsel %vm416, %v359, 0
      %v652 = vsel %vm416, %v360, 0
      %v655 = vsel %vm416, %v361, 0
      %v658 = vsel %vm416, %v362, 0
      %v661 = vsel %vm416, %v363, 0
      %v664 = vsel %vm416, %v364, 0
      %v667 = vsel %vm416, %v365, 0
      %v670 = vsel %vm416, %v366, 0
      %v673 = vsel %vm416, %v367, 0
      %v676 = vsel %vm416, %v368, 0
      %v679 = vsel %vm416, %v369, 0
      %v682 = vsel %vm416, %v370, 0
      %v685 = vsel %vm416, %v371, 0
      %v688 = vsel %vm416, %v372, 0
      %v691 = vsel %vm416, %v373, 0
      %v694 = vsel %vm416, %v374, 0
      %v697 = vsel %vm416, %v375, 0
      %v700 = vsel %vm416, %v376, 0
      %v703 = vsel %vm416, %v377, 0
      %v706 = vsel %vm416, %v378, 0
      %v709 = vsel %vm416, %v379, 0
      %v712 = vsel %vm416, %v380, 0
      %v715 = vsel %vm416, %v381, 0
      %v718 = vsel %vm416, %v382, 0
      %v721 = vsel %vm416, %v383, 0
      %v724 = vsel %vm416, %v384, 0
      %v727 = vsel %vm416, %v385, 0
      %v730 = vsel %vm416, %v386, 0
      %v733 = vsel %vm416, %v387, 0
      %v736 = vsel %vm416, %v388, 0
      %v739 = vsel %vm416, %v389, 0
      %v742 = vsel %vm416, %v390, 0
      %v745 = vsel %vm416, %v391, 0
      %v748 = vsel %vm416, %v392, 0
      %v751 = vsel %vm416, %v393, 0
      %v754 = vsel %vm416, %v394, 0
      %v757 = vsel %vm416, %v395, 0
      %v760 = vsel %vm416, %v396, 0
      %v763 = vsel %vm416, %v397, 0
      %v766 = vsel %vm416, %v398, 0
      %v769 = vsel %vm416, %v399, 0
      %v772 = vsel %vm416, %v400, 0
      %v775 = vsel %vm416, %v401, 0
      %v778 = vsel %vm416, %v402, 0
      %v781 = vsel %vm416, %v403, 0
      %v784 = vsel %vm416, %v404, 0
      %v787 = vsel %vm416, %v405, 0
      %v790 = vsel %vm416, %v406, 0
      %v793 = vsel %vm416, %v407, 0
      %v796 = vsel %vm416, %v408, 0
      %v799 = vsel %vm416, %v409, 0
      %801 = vmatpush.msra.mxu0 0.0
      %802 = vmatpush.msra.mxu0 0.0
      %803 = vmatpush.msra.mxu0 0.0
      %804 = vmatpush.msra.mxu0 0.0
      %805 = vmatpush.msra.mxu0 0.0
      %806 = vmatpush.msra.mxu0 0.0
      %807 = vmatpush.msra.mxu0 0.0
      %808 = vmatpush.msra.mxu0 0.0
      %809 = vmatpush.msra.mxu0 0.0
      %810 = vmatpush.msra.mxu0 0.0
      %811 = vmatpush.msra.mxu0 0.0
      %812 = vmatpush.msra.mxu0 0.0
      %813 = vmatpush.msra.mxu0 0.0
      %814 = vmatpush.msra.mxu0 0.0
      %815 = vmatpush.msra.mxu0 %v411
      %816 = vmatpush.msra.mxu0 %v410
      %817 = vmatmul.f32.gmra.mxu0 %v418
      %v818 = vpop.f32.mrf.mxu0
      %v819 = vadd.f32 %v414, %v818
      %820 = vmatmul.f32.gmra.mxu0 %v421
      %v821 = vpop.f32.mrf.mxu0
      %v822 = vadd.f32 %v414, %v821
      %823 = vmatmul.f32.gmra.mxu0 %v424
      %v824 = vpop.f32.mrf.mxu0
      %v825 = vadd.f32 %v414, %v824
      %826 = vmatmul.f32.gmra.mxu0 %v427
      %v827 = vpop.f32.mrf.mxu0
      %v828 = vadd.f32 %v414, %v827
      %829 = vmatmul.f32.gmra.mxu0 %v430
      %v830 = vpop.f32.mrf.mxu0
      %v831 = vadd.f32 %v414, %v830
      %832 = vmatmul.f32.gmra.mxu0 %v433
      %v833 = vpop.f32.mrf.mxu0
      %v834 = vadd.f32 %v414, %v833
      %835 = vmatmul.f32.gmra.mxu0 %v436
      %v836 = vpop.f32.mrf.mxu0
      %v837 = vadd.f32 %v414, %v836
      %838 = vmatmul.f32.gmra.mxu0 %v439
      %v839 = vpop.f32.mrf.mxu0
      %v840 = vadd.f32 %v414, %v839
      %841 = vmatmul.f32.gmra.mxu0 %v442
      %v842 = vpop.f32.mrf.mxu0
      %v843 = vadd.f32 %v414, %v842
      %844 = vmatmul.f32.gmra.mxu0 %v445
      %v845 = vpop.f32.mrf.mxu0
      %v846 = vadd.f32 %v414, %v845
      %847 = vmatmul.f32.gmra.mxu0 %v448
      %v848 = vpop.f32.mrf.mxu0
      %v849 = vadd.f32 %v414, %v848
      %850 = vmatmul.f32.gmra.mxu0 %v451
      %v851 = vpop.f32.mrf.mxu0
      %v852 = vadd.f32 %v414, %v851
      %853 = vmatmul.f32.gmra.mxu0 %v454
      %v854 = vpop.f32.mrf.mxu0
      %v855 = vadd.f32 %v414, %v854
      %856 = vmatmul.f32.gmra.mxu0 %v457
      %v857 = vpop.f32.mrf.mxu0
      %v858 = vadd.f32 %v414, %v857
      %859 = vmatmul.f32.gmra.mxu0 %v460
      %v860 = vpop.f32.mrf.mxu0
      %v861 = vadd.f32 %v414, %v860
      %862 = vmatmul.f32.gmra.mxu0 %v463
      %v863 = vpop.f32.mrf.mxu0
      %v864 = vadd.f32 %v414, %v863
      %865 = vmatmul.f32.gmra.mxu0 %v466
      %v866 = vpop.f32.mrf.mxu0
      %v867 = vadd.f32 %v414, %v866
      %868 = vmatmul.f32.gmra.mxu0 %v469
      %v869 = vpop.f32.mrf.mxu0
      %v870 = vadd.f32 %v414, %v869
      %871 = vmatmul.f32.gmra.mxu0 %v472
      %v872 = vpop.f32.mrf.mxu0
      %v873 = vadd.f32 %v414, %v872
      %874 = vmatmul.f32.gmra.mxu0 %v475
      %v875 = vpop.f32.mrf.mxu0
      %v876 = vadd.f32 %v414, %v875
      %877 = vmatmul.f32.gmra.mxu0 %v478
      %v878 = vpop.f32.mrf.mxu0
      %v879 = vadd.f32 %v414, %v878
      %880 = vmatmul.f32.gmra.mxu0 %v481
      %v881 = vpop.f32.mrf.mxu0
      %v882 = vadd.f32 %v414, %v881
      %883 = vmatmul.f32.gmra.mxu0 %v484
      %v884 = vpop.f32.mrf.mxu0
      %v885 = vadd.f32 %v414, %v884
      %886 = vmatmul.f32.gmra.mxu0 %v487
      %v887 = vpop.f32.mrf.mxu0
      %v888 = vadd.f32 %v414, %v887
      %889 = vmatmul.f32.gmra.mxu0 %v490
      %v890 = vpop.f32.mrf.mxu0
      %v891 = vadd.f32 %v414, %v890
      %892 = vmatmul.f32.gmra.mxu0 %v493
      %v893 = vpop.f32.mrf.mxu0
      %v894 = vadd.f32 %v414, %v893
      %895 = vmatmul.f32.gmra.mxu0 %v496
      %v896 = vpop.f32.mrf.mxu0
      %v897 = vadd.f32 %v414, %v896
      %898 = vmatmul.f32.gmra.mxu0 %v499
      %v899 = vpop.f32.mrf.mxu0
      %v900 = vadd.f32 %v414, %v899
      %901 = vmatmul.f32.gmra.mxu0 %v502
      %v902 = vpop.f32.mrf.mxu0
      %v903 = vadd.f32 %v414, %v902
      %904 = vmatmul.f32.gmra.mxu0 %v505
      %v905 = vpop.f32.mrf.mxu0
      %v906 = vadd.f32 %v414, %v905
      %907 = vmatmul.f32.gmra.mxu0 %v508
      %v908 = vpop.f32.mrf.mxu0
      %v909 = vadd.f32 %v414, %v908
      %910 = vmatmul.f32.gmra.mxu0 %v511
      %v911 = vpop.f32.mrf.mxu0
      %v912 = vadd.f32 %v414, %v911
      %913 = vmatmul.f32.gmra.mxu0 %v514
      %v914 = vpop.f32.mrf.mxu0
      %v915 = vadd.f32 %v414, %v914
      %916 = vmatmul.f32.gmra.mxu0 %v517
      %v917 = vpop.f32.mrf.mxu0
      %v918 = vadd.f32 %v414, %v917
      %919 = vmatmul.f32.gmra.mxu0 %v520
      %v920 = vpop.f32.mrf.mxu0
      %v921 = vadd.f32 %v414, %v920
      %922 = vmatmul.f32.gmra.mxu0 %v523
      %v923 = vpop.f32.mrf.mxu0
      %v924 = vadd.f32 %v414, %v923
      %925 = vmatmul.f32.gmra.mxu0 %v526
      %v926 = vpop.f32.mrf.mxu0
      %v927 = vadd.f32 %v414, %v926
      %928 = vmatmul.f32.gmra.mxu0 %v529
      %v929 = vpop.f32.mrf.mxu0
      %v930 = vadd.f32 %v414, %v929
      %931 = vmatmul.f32.gmra.mxu0 %v532
      %v932 = vpop.f32.mrf.mxu0
      %v933 = vadd.f32 %v414, %v932
      %934 = vmatmul.f32.gmra.mxu0 %v535
      %v935 = vpop.f32.mrf.mxu0
      %v936 = vadd.f32 %v414, %v935
      %937 = vmatmul.f32.gmra.mxu0 %v538
      %v938 = vpop.f32.mrf.mxu0
      %v939 = vadd.f32 %v414, %v938
      %940 = vmatmul.f32.gmra.mxu0 %v541
      %v941 = vpop.f32.mrf.mxu0
      %v942 = vadd.f32 %v414, %v941
      %943 = vmatmul.f32.gmra.mxu0 %v544
      %v944 = vpop.f32.mrf.mxu0
      %v945 = vadd.f32 %v414, %v944
      %946 = vmatmul.f32.gmra.mxu0 %v547
      %v947 = vpop.f32.mrf.mxu0
      %v948 = vadd.f32 %v414, %v947
      %949 = vmatmul.f32.gmra.mxu0 %v550
      %v950 = vpop.f32.mrf.mxu0
      %v951 = vadd.f32 %v414, %v950
      %952 = vmatmul.f32.gmra.mxu0 %v553
      %v953 = vpop.f32.mrf.mxu0
      %v954 = vadd.f32 %v414, %v953
      %955 = vmatmul.f32.gmra.mxu0 %v556
      %v956 = vpop.f32.mrf.mxu0
      %v957 = vadd.f32 %v414, %v956
      %958 = vmatmul.f32.gmra.mxu0 %v559
      %v959 = vpop.f32.mrf.mxu0
      %v960 = vadd.f32 %v414, %v959
      %961 = vmatmul.f32.gmra.mxu0 %v562
      %v962 = vpop.f32.mrf.mxu0
      %v963 = vadd.f32 %v414, %v962
      %964 = vmatmul.f32.gmra.mxu0 %v565
      %v965 = vpop.f32.mrf.mxu0
      %v966 = vadd.f32 %v414, %v965
      %967 = vmatmul.f32.gmra.mxu0 %v568
      %v968 = vpop.f32.mrf.mxu0
      %v969 = vadd.f32 %v414, %v968
      %970 = vmatmul.f32.gmra.mxu0 %v571
      %v971 = vpop.f32.mrf.mxu0
      %v972 = vadd.f32 %v414, %v971
      %973 = vmatmul.f32.gmra.mxu0 %v574
      %v974 = vpop.f32.mrf.mxu0
      %v975 = vadd.f32 %v414, %v974
      %976 = vmatmul.f32.gmra.mxu0 %v577
      %v977 = vpop.f32.mrf.mxu0
      %v978 = vadd.f32 %v414, %v977
      %979 = vmatmul.f32.gmra.mxu0 %v580
      %v980 = vpop.f32.mrf.mxu0
      %v981 = vadd.f32 %v414, %v980
      %982 = vmatmul.f32.gmra.mxu0 %v583
      %v983 = vpop.f32.mrf.mxu0
      %v984 = vadd.f32 %v414, %v983
      %985 = vmatmul.f32.gmra.mxu0 %v586
      %v986 = vpop.f32.mrf.mxu0
      %v987 = vadd.f32 %v414, %v986
      %988 = vmatmul.f32.gmra.mxu0 %v589
      %v989 = vpop.f32.mrf.mxu0
      %v990 = vadd.f32 %v414, %v989
      %991 = vmatmul.f32.gmra.mxu0 %v592
      %v992 = vpop.f32.mrf.mxu0
      %v993 = vadd.f32 %v414, %v992
      %994 = vmatmul.f32.gmra.mxu0 %v595
      %v995 = vpop.f32.mrf.mxu0
      %v996 = vadd.f32 %v414, %v995
      %997 = vmatmul.f32.gmra.mxu0 %v598
      %v998 = vpop.f32.mrf.mxu0
      %v999 = vadd.f32 %v414, %v998
      %1000 = vmatmul.f32.gmra.mxu0 %v601
      %v1001 = vpop.f32.mrf.mxu0
      %v1002 = vadd.f32 %v414, %v1001
      %1003 = vmatmul.f32.gmra.mxu0 %v604
      %v1004 = vpop.f32.mrf.mxu0
      %v1005 = vadd.f32 %v414, %v1004
      %1006 = vmatmul.f32.gmra.mxu0 %v607
      %v1007 = vpop.f32.mrf.mxu0
      %v1008 = vadd.f32 %v414, %v1007
      %1009 = vmatmul.f32.gmra.mxu0 %v610
      %v1010 = vpop.f32.mrf.mxu0
      %v1011 = vadd.f32 %v414, %v1010
      %1012 = vmatmul.f32.gmra.mxu0 %v613
      %v1013 = vpop.f32.mrf.mxu0
      %v1014 = vadd.f32 %v414, %v1013
      %1015 = vmatmul.f32.gmra.mxu0 %v616
      %v1016 = vpop.f32.mrf.mxu0
      %v1017 = vadd.f32 %v414, %v1016
      %1018 = vmatmul.f32.gmra.mxu0 %v619
      %v1019 = vpop.f32.mrf.mxu0
      %v1020 = vadd.f32 %v414, %v1019
      %1021 = vmatmul.f32.gmra.mxu0 %v622
      %v1022 = vpop.f32.mrf.mxu0
      %v1023 = vadd.f32 %v414, %v1022
      %1024 = vmatmul.f32.gmra.mxu0 %v625
      %v1025 = vpop.f32.mrf.mxu0
      %v1026 = vadd.f32 %v414, %v1025
      %1027 = vmatmul.f32.gmra.mxu0 %v628
      %v1028 = vpop.f32.mrf.mxu0
      %v1029 = vadd.f32 %v414, %v1028
      %1030 = vmatmul.f32.gmra.mxu0 %v631
      %v1031 = vpop.f32.mrf.mxu0
      %v1032 = vadd.f32 %v414, %v1031
      %1033 = vmatmul.f32.gmra.mxu0 %v634
      %v1034 = vpop.f32.mrf.mxu0
      %v1035 = vadd.f32 %v414, %v1034
      %1036 = vmatmul.f32.gmra.mxu0 %v637
      %v1037 = vpop.f32.mrf.mxu0
      %v1038 = vadd.f32 %v414, %v1037
      %1039 = vmatmul.f32.gmra.mxu0 %v640
      %v1040 = vpop.f32.mrf.mxu0
      %v1041 = vadd.f32 %v414, %v1040
      %1042 = vmatmul.f32.gmra.mxu0 %v643
      %v1043 = vpop.f32.mrf.mxu0
      %v1044 = vadd.f32 %v414, %v1043
      %1045 = vmatmul.f32.gmra.mxu0 %v646
      %v1046 = vpop.f32.mrf.mxu0
      %v1047 = vadd.f32 %v414, %v1046
      %1048 = vmatmul.f32.gmra.mxu0 %v649
      %v1049 = vpop.f32.mrf.mxu0
      %v1050 = vadd.f32 %v414, %v1049
      %1051 = vmatmul.f32.gmra.mxu0 %v652
      %v1052 = vpop.f32.mrf.mxu0
      %v1053 = vadd.f32 %v414, %v1052
      %1054 = vmatmul.f32.gmra.mxu0 %v655
      %v1055 = vpop.f32.mrf.mxu0
      %v1056 = vadd.f32 %v414, %v1055
      %1057 = vmatmul.f32.gmra.mxu0 %v658
      %v1058 = vpop.f32.mrf.mxu0
      %v1059 = vadd.f32 %v414, %v1058
      %1060 = vmatmul.f32.gmra.mxu0 %v661
      %v1061 = vpop.f32.mrf.mxu0
      %v1062 = vadd.f32 %v414, %v1061
      %1063 = vmatmul.f32.gmra.mxu0 %v664
      %v1064 = vpop.f32.mrf.mxu0
      %v1065 = vadd.f32 %v414, %v1064
      %1066 = vmatmul.f32.gmra.mxu0 %v667
      %v1067 = vpop.f32.mrf.mxu0
      %v1068 = vadd.f32 %v414, %v1067
      %1069 = vmatmul.f32.gmra.mxu0 %v670
      %v1070 = vpop.f32.mrf.mxu0
      %v1071 = vadd.f32 %v414, %v1070
      %1072 = vmatmul.f32.gmra.mxu0 %v673
      %v1073 = vpop.f32.mrf.mxu0
      %v1074 = vadd.f32 %v414, %v1073
      %1075 = vmatmul.f32.gmra.mxu0 %v676
      %v1076 = vpop.f32.mrf.mxu0
      %v1077 = vadd.f32 %v414, %v1076
      %1078 = vmatmul.f32.gmra.mxu0 %v679
      %v1079 = vpop.f32.mrf.mxu0
      %v1080 = vadd.f32 %v414, %v1079
      %1081 = vmatmul.f32.gmra.mxu0 %v682
      %v1082 = vpop.f32.mrf.mxu0
      %v1083 = vadd.f32 %v414, %v1082
      %1084 = vmatmul.f32.gmra.mxu0 %v685
      %v1085 = vpop.f32.mrf.mxu0
      %v1086 = vadd.f32 %v414, %v1085
      %1087 = vmatmul.f32.gmra.mxu0 %v688
      %v1088 = vpop.f32.mrf.mxu0
      %v1089 = vadd.f32 %v414, %v1088
      %1090 = vmatmul.f32.gmra.mxu0 %v691
      %v1091 = vpop.f32.mrf.mxu0
      %v1092 = vadd.f32 %v414, %v1091
      %1093 = vmatmul.f32.gmra.mxu0 %v694
      %v1094 = vpop.f32.mrf.mxu0
      %v1095 = vadd.f32 %v414, %v1094
      %1096 = vmatmul.f32.gmra.mxu0 %v697
      %v1097 = vpop.f32.mrf.mxu0
      %v1098 = vadd.f32 %v414, %v1097
      %1099 = vmatmul.f32.gmra.mxu0 %v700
      %v1100 = vpop.f32.mrf.mxu0
      %v1101 = vadd.f32 %v414, %v1100
      %1102 = vmatmul.f32.gmra.mxu0 %v703
      %v1103 = vpop.f32.mrf.mxu0
      %v1104 = vadd.f32 %v414, %v1103
      %1105 = vmatmul.f32.gmra.mxu0 %v706
      %v1106 = vpop.f32.mrf.mxu0
      %v1107 = vadd.f32 %v414, %v1106
      %1108 = vmatmul.f32.gmra.mxu0 %v709
      %v1109 = vpop.f32.mrf.mxu0
      %v1110 = vadd.f32 %v414, %v1109
      %1111 = vmatmul.f32.gmra.mxu0 %v712
      %v1112 = vpop.f32.mrf.mxu0
      %v1113 = vadd.f32 %v414, %v1112
      %1114 = vmatmul.f32.gmra.mxu0 %v715
      %v1115 = vpop.f32.mrf.mxu0
      %v1116 = vadd.f32 %v414, %v1115
      %1117 = vmatmul.f32.gmra.mxu0 %v718
      %v1118 = vpop.f32.mrf.mxu0
      %v1119 = vadd.f32 %v414, %v1118
      %1120 = vmatmul.f32.gmra.mxu0 %v721
      %v1121 = vpop.f32.mrf.mxu0
      %v1122 = vadd.f32 %v414, %v1121
      %1123 = vmatmul.f32.gmra.mxu0 %v724
      %v1124 = vpop.f32.mrf.mxu0
      %v1125 = vadd.f32 %v414, %v1124
      %1126 = vmatmul.f32.gmra.mxu0 %v727
      %v1127 = vpop.f32.mrf.mxu0
      %v1128 = vadd.f32 %v414, %v1127
      %1129 = vmatmul.f32.gmra.mxu0 %v730
      %v1130 = vpop.f32.mrf.mxu0
      %v1131 = vadd.f32 %v414, %v1130
      %1132 = vmatmul.f32.gmra.mxu0 %v733
      %v1133 = vpop.f32.mrf.mxu0
      %v1134 = vadd.f32 %v414, %v1133
      %1135 = vmatmul.f32.gmra.mxu0 %v736
      %v1136 = vpop.f32.mrf.mxu0
      %v1137 = vadd.f32 %v414, %v1136
      %1138 = vmatmul.f32.gmra.mxu0 %v739
      %v1139 = vpop.f32.mrf.mxu0
      %v1140 = vadd.f32 %v414, %v1139
      %1141 = vmatmul.f32.gmra.mxu0 %v742
      %v1142 = vpop.f32.mrf.mxu0
      %v1143 = vadd.f32 %v414, %v1142
      %1144 = vmatmul.f32.gmra.mxu0 %v745
      %v1145 = vpop.f32.mrf.mxu0
      %v1146 = vadd.f32 %v414, %v1145
      %1147 = vmatmul.f32.gmra.mxu0 %v748
      %v1148 = vpop.f32.mrf.mxu0
      %v1149 = vadd.f32 %v414, %v1148
      %1150 = vmatmul.f32.gmra.mxu0 %v751
      %v1151 = vpop.f32.mrf.mxu0
      %v1152 = vadd.f32 %v414, %v1151
      %1153 = vmatmul.f32.gmra.mxu0 %v754
      %v1154 = vpop.f32.mrf.mxu0
      %v1155 = vadd.f32 %v414, %v1154
      %1156 = vmatmul.f32.gmra.mxu0 %v757
      %v1157 = vpop.f32.mrf.mxu0
      %v1158 = vadd.f32 %v414, %v1157
      %1159 = vmatmul.f32.gmra.mxu0 %v760
      %v1160 = vpop.f32.mrf.mxu0
      %v1161 = vadd.f32 %v414, %v1160
      %1162 = vmatmul.f32.gmra.mxu0 %v763
      %v1163 = vpop.f32.mrf.mxu0
      %v1164 = vadd.f32 %v414, %v1163
      %1165 = vmatmul.f32.gmra.mxu0 %v766
      %v1166 = vpop.f32.mrf.mxu0
      %v1167 = vadd.f32 %v414, %v1166
      %1168 = vmatmul.f32.gmra.mxu0 %v769
      %v1169 = vpop.f32.mrf.mxu0
      %v1170 = vadd.f32 %v414, %v1169
      %1171 = vmatmul.f32.gmra.mxu0 %v772
      %v1172 = vpop.f32.mrf.mxu0
      %v1173 = vadd.f32 %v414, %v1172
      %1174 = vmatmul.f32.gmra.mxu0 %v775
      %v1175 = vpop.f32.mrf.mxu0
      %v1176 = vadd.f32 %v414, %v1175
      %1177 = vmatmul.f32.gmra.mxu0 %v778
      %v1178 = vpop.f32.mrf.mxu0
      %v1179 = vadd.f32 %v414, %v1178
      %1180 = vmatmul.f32.gmra.mxu0 %v781
      %v1181 = vpop.f32.mrf.mxu0
      %v1182 = vadd.f32 %v414, %v1181
      %1183 = vmatmul.f32.gmra.mxu0 %v784
      %v1184 = vpop.f32.mrf.mxu0
      %v1185 = vadd.f32 %v414, %v1184
      %1186 = vmatmul.f32.gmra.mxu0 %v787
      %v1187 = vpop.f32.mrf.mxu0
      %v1188 = vadd.f32 %v414, %v1187
      %1189 = vmatmul.f32.gmra.mxu0 %v790
      %v1190 = vpop.f32.mrf.mxu0
      %v1191 = vadd.f32 %v414, %v1190
      %1192 = vmatmul.f32.gmra.mxu0 %v793
      %v1193 = vpop.f32.mrf.mxu0
      %v1194 = vadd.f32 %v414, %v1193
      %1195 = vmatmul.f32.gmra.mxu0 %v796
      %v1196 = vpop.f32.mrf.mxu0
      %v1197 = vadd.f32 %v414, %v1196
      %1198 = vmatmul.f32.gmra.mxu0 %v799
      %v1199 = vpop.f32.mrf.mxu0
      %v1200 = vadd.f32 %v414, %v1199
      %1201 = vdwg.mxu0
      %v1202 = vmax.f32 %v819, 0.0
      %v1203 = vmax.f32 %v822, 0.0
      %v1204 = vmax.f32 %v825, 0.0
      %v1205 = vmax.f32 %v828, 0.0
      %v1206 = vmax.f32 %v831, 0.0
      %v1207 = vmax.f32 %v834, 0.0
      %v1208 = vmax.f32 %v837, 0.0
      %v1209 = vmax.f32 %v840, 0.0
      %v1210 = vmax.f32 %v843, 0.0
      %v1211 = vmax.f32 %v846, 0.0
      %v1212 = vmax.f32 %v849, 0.0
      %v1213 = vmax.f32 %v852, 0.0
      %v1214 = vmax.f32 %v855, 0.0
      %v1215 = vmax.f32 %v858, 0.0
      %v1216 = vmax.f32 %v861, 0.0
      %v1217 = vmax.f32 %v864, 0.0
      %v1218 = vmax.f32 %v867, 0.0
      %v1219 = vmax.f32 %v870, 0.0
      %v1220 = vmax.f32 %v873, 0.0
      %v1221 = vmax.f32 %v876, 0.0
      %v1222 = vmax.f32 %v879, 0.0
      %v1223 = vmax.f32 %v882, 0.0
      %v1224 = vmax.f32 %v885, 0.0
      %v1225 = vmax.f32 %v888, 0.0
      %v1226 = vmax.f32 %v891, 0.0
      %v1227 = vmax.f32 %v894, 0.0
      %v1228 = vmax.f32 %v897, 0.0
      %v1229 = vmax.f32 %v900, 0.0
      %v1230 = vmax.f32 %v903, 0.0
      %v1231 = vmax.f32 %v906, 0.0
      %v1232 = vmax.f32 %v909, 0.0
      %v1233 = vmax.f32 %v912, 0.0
      %v1234 = vmax.f32 %v915, 0.0
      %v1235 = vmax.f32 %v918, 0.0
      %v1236 = vmax.f32 %v921, 0.0
      %v1237 = vmax.f32 %v924, 0.0
      %v1238 = vmax.f32 %v927, 0.0
      %v1239 = vmax.f32 %v930, 0.0
      %v1240 = vmax.f32 %v933, 0.0
      %v1241 = vmax.f32 %v936, 0.0
      %v1242 = vmax.f32 %v939, 0.0
      %v1243 = vmax.f32 %v942, 0.0
      %v1244 = vmax.f32 %v945, 0.0
      %v1245 = vmax.f32 %v948, 0.0
      %v1246 = vmax.f32 %v951, 0.0
      %v1247 = vmax.f32 %v954, 0.0
      %v1248 = vmax.f32 %v957, 0.0
      %v1249 = vmax.f32 %v960, 0.0
      %v1250 = vmax.f32 %v963, 0.0
      %v1251 = vmax.f32 %v966, 0.0
      %v1252 = vmax.f32 %v969, 0.0
      %v1253 = vmax.f32 %v972, 0.0
      %v1254 = vmax.f32 %v975, 0.0
      %v1255 = vmax.f32 %v978, 0.0
      %v1256 = vmax.f32 %v981, 0.0
      %v1257 = vmax.f32 %v984, 0.0
      %v1258 = vmax.f32 %v987, 0.0
      %v1259 = vmax.f32 %v990, 0.0
      %v1260 = vmax.f32 %v993, 0.0
      %v1261 = vmax.f32 %v996, 0.0
      %v1262 = vmax.f32 %v999, 0.0
      %v1263 = vmax.f32 %v1002, 0.0
      %v1264 = vmax.f32 %v1005, 0.0
      %v1265 = vmax.f32 %v1008, 0.0
      %v1266 = vmax.f32 %v1011, 0.0
      %v1267 = vmax.f32 %v1014, 0.0
      %v1268 = vmax.f32 %v1017, 0.0
      %v1269 = vmax.f32 %v1020, 0.0
      %v1270 = vmax.f32 %v1023, 0.0
      %v1271 = vmax.f32 %v1026, 0.0
      %v1272 = vmax.f32 %v1029, 0.0
      %v1273 = vmax.f32 %v1032, 0.0
      %v1274 = vmax.f32 %v1035, 0.0
      %v1275 = vmax.f32 %v1038, 0.0
      %v1276 = vmax.f32 %v1041, 0.0
      %v1277 = vmax.f32 %v1044, 0.0
      %v1278 = vmax.f32 %v1047, 0.0
      %v1279 = vmax.f32 %v1050, 0.0
      %v1280 = vmax.f32 %v1053, 0.0
      %v1281 = vmax.f32 %v1056, 0.0
      %v1282 = vmax.f32 %v1059, 0.0
      %v1283 = vmax.f32 %v1062, 0.0
      %v1284 = vmax.f32 %v1065, 0.0
      %v1285 = vmax.f32 %v1068, 0.0
      %v1286 = vmax.f32 %v1071, 0.0
      %v1287 = vmax.f32 %v1074, 0.0
      %v1288 = vmax.f32 %v1077, 0.0
      %v1289 = vmax.f32 %v1080, 0.0
      %v1290 = vmax.f32 %v1083, 0.0
      %v1291 = vmax.f32 %v1086, 0.0
      %v1292 = vmax.f32 %v1089, 0.0
      %v1293 = vmax.f32 %v1092, 0.0
      %v1294 = vmax.f32 %v1095, 0.0
      %v1295 = vmax.f32 %v1098, 0.0
      %v1296 = vmax.f32 %v1101, 0.0
      %v1297 = vmax.f32 %v1104, 0.0
      %v1298 = vmax.f32 %v1107, 0.0
      %v1299 = vmax.f32 %v1110, 0.0
      %v1300 = vmax.f32 %v1113, 0.0
      %v1301 = vmax.f32 %v1116, 0.0
      %v1302 = vmax.f32 %v1119, 0.0
      %v1303 = vmax.f32 %v1122, 0.0
      %v1304 = vmax.f32 %v1125, 0.0
      %v1305 = vmax.f32 %v1128, 0.0
      %v1306 = vmax.f32 %v1131, 0.0
      %v1307 = vmax.f32 %v1134, 0.0
      %v1308 = vmax.f32 %v1137, 0.0
      %v1309 = vmax.f32 %v1140, 0.0
      %v1310 = vmax.f32 %v1143, 0.0
      %v1311 = vmax.f32 %v1146, 0.0
      %v1312 = vmax.f32 %v1149, 0.0
      %v1313 = vmax.f32 %v1152, 0.0
      %v1314 = vmax.f32 %v1155, 0.0
      %v1315 = vmax.f32 %v1158, 0.0
      %v1316 = vmax.f32 %v1161, 0.0
      %v1317 = vmax.f32 %v1164, 0.0
      %v1318 = vmax.f32 %v1167, 0.0
      %v1319 = vmax.f32 %v1170, 0.0
      %v1320 = vmax.f32 %v1173, 0.0
      %v1321 = vmax.f32 %v1176, 0.0
      %v1322 = vmax.f32 %v1179, 0.0
      %v1323 = vmax.f32 %v1182, 0.0
      %v1324 = vmax.f32 %v1185, 0.0
      %v1325 = vmax.f32 %v1188, 0.0
      %v1326 = vmax.f32 %v1191, 0.0
      %v1327 = vmax.f32 %v1194, 0.0
      %v1328 = vmax.f32 %v1197, 0.0
      %v1329 = vmax.f32 %v1200, 0.0
      %v1330 = vld [vmem:[%s3] sm:$0xff]
      %v1331 = vld [vmem:[%s3 + $0x8] sm:$0xff]
      %v1332 = vld [vmem:[%s3 + $0x10] sm:$0xff]
      %v1333 = vld [vmem:[%s3 + $0x18] sm:$0xff]
      %v1334 = vld [vmem:[%s4] sm:$0x1]
      %v1336 = vperm.slane %v1334, 0
      %vm1338 = vcmask 261120
      %v1340 = vsel %vm1338, %v1202, 0
      %v1343 = vsel %vm1338, %v1203, 0
      %v1346 = vsel %vm1338, %v1204, 0
      %v1349 = vsel %vm1338, %v1205, 0
      %v1352 = vsel %vm1338, %v1206, 0
      %v1355 = vsel %vm1338, %v1207, 0
      %v1358 = vsel %vm1338, %v1208, 0
      %v1361 = vsel %vm1338, %v1209, 0
      %v1364 = vsel %vm1338, %v1210, 0
      %v1367 = vsel %vm1338, %v1211, 0
      %v1370 = vsel %vm1338, %v1212, 0
      %v1373 = vsel %vm1338, %v1213, 0
      %v1376 = vsel %vm1338, %v1214, 0
      %v1379 = vsel %vm1338, %v1215, 0
      %v1382 = vsel %vm1338, %v1216, 0
      %v1385 = vsel %vm1338, %v1217, 0
      %v1388 = vsel %vm1338, %v1218, 0
      %v1391 = vsel %vm1338, %v1219, 0
      %v1394 = vsel %vm1338, %v1220, 0
      %v1397 = vsel %vm1338, %v1221, 0
      %v1400 = vsel %vm1338, %v1222, 0
      %v1403 = vsel %vm1338, %v1223, 0
      %v1406 = vsel %vm1338, %v1224, 0
      %v1409 = vsel %vm1338, %v1225, 0
      %v1412 = vsel %vm1338, %v1226, 0
      %v1415 = vsel %vm1338, %v1227, 0
      %v1418 = vsel %vm1338, %v1228, 0
      %v1421 = vsel %vm1338, %v1229, 0
      %v1424 = vsel %vm1338, %v1230, 0
      %v1427 = vsel %vm1338, %v1231, 0
      %v1430 = vsel %vm1338, %v1232, 0
      %v1433 = vsel %vm1338, %v1233, 0
      %v1436 = vsel %vm1338, %v1234, 0
      %v1439 = vsel %vm1338, %v1235, 0
      %v1442 = vsel %vm1338, %v1236, 0
      %v1445 = vsel %vm1338, %v1237, 0
      %v1448 = vsel %vm1338, %v1238, 0
      %v1451 = vsel %vm1338, %v1239, 0
      %v1454 = vsel %vm1338, %v1240, 0
      %v1457 = vsel %vm1338, %v1241, 0
      %v1460 = vsel %vm1338, %v1242, 0
      %v1463 = vsel %vm1338, %v1243, 0
      %v1466 = vsel %vm1338, %v1244, 0
      %v1469 = vsel %vm1338, %v1245, 0
      %v1472 = vsel %vm1338, %v1246, 0
      %v1475 = vsel %vm1338, %v1247, 0
      %v1478 = vsel %vm1338, %v1248, 0
      %v1481 = vsel %vm1338, %v1249, 0
      %v1484 = vsel %vm1338, %v1250, 0
      %v1487 = vsel %vm1338, %v1251, 0
      %v1490 = vsel %vm1338, %v1252, 0
      %v1493 = vsel %vm1338, %v1253, 0
      %v1496 = vsel %vm1338, %v1254, 0
      %v1499 = vsel %vm1338, %v1255, 0
      %v1502 = vsel %vm1338, %v1256, 0
      %v1505 = vsel %vm1338, %v1257, 0
      %v1508 = vsel %vm1338, %v1258, 0
      %v1511 = vsel %vm1338, %v1259, 0
      %v1514 = vsel %vm1338, %v1260, 0
      %v1517 = vsel %vm1338, %v1261, 0
      %v1520 = vsel %vm1338, %v1262, 0
      %v1523 = vsel %vm1338, %v1263, 0
      %v1526 = vsel %vm1338, %v1264, 0
      %v1529 = vsel %vm1338, %v1265, 0
      %v1532 = vsel %vm1338, %v1266, 0
      %v1535 = vsel %vm1338, %v1267, 0
      %v1538 = vsel %vm1338, %v1268, 0
      %v1541 = vsel %vm1338, %v1269, 0
      %v1544 = vsel %vm1338, %v1270, 0
      %v1547 = vsel %vm1338, %v1271, 0
      %v1550 = vsel %vm1338, %v1272, 0
      %v1553 = vsel %vm1338, %v1273, 0
      %v1556 = vsel %vm1338, %v1274, 0
      %v1559 = vsel %vm1338, %v1275, 0
      %v1562 = vsel %vm1338, %v1276, 0
      %v1565 = vsel %vm1338, %v1277, 0
      %v1568 = vsel %vm1338, %v1278, 0
      %v1571 = vsel %vm1338, %v1279, 0
      %v1574 = vsel %vm1338, %v1280, 0
      %v1577 = vsel %vm1338, %v1281, 0
      %v1580 = vsel %vm1338, %v1282, 0
      %v1583 = vsel %vm1338, %v1283, 0
      %v1586 = vsel %vm1338, %v1284, 0
      %v1589 = vsel %vm1338, %v1285, 0
      %v1592 = vsel %vm1338, %v1286, 0
      %v1595 = vsel %vm1338, %v1287, 0
      %v1598 = vsel %vm1338, %v1288, 0
      %v1601 = vsel %vm1338, %v1289, 0
      %v1604 = vsel %vm1338, %v1290, 0
      %v1607 = vsel %vm1338, %v1291, 0
      %v1610 = vsel %vm1338, %v1292, 0
      %v1613 = vsel %vm1338, %v1293, 0
      %v1616 = vsel %vm1338, %v1294, 0
      %v1619 = vsel %vm1338, %v1295, 0
      %v1622 = vsel %vm1338, %v1296, 0
      %v1625 = vsel %vm1338, %v1297, 0
      %v1628 = vsel %vm1338, %v1298, 0
      %v1631 = vsel %vm1338, %v1299, 0
      %v1634 = vsel %vm1338, %v1300, 0
      %v1637 = vsel %vm1338, %v1301, 0
      %v1640 = vsel %vm1338, %v1302, 0
      %v1643 = vsel %vm1338, %v1303, 0
      %v1646 = vsel %vm1338, %v1304, 0
      %v1649 = vsel %vm1338, %v1305, 0
      %v1652 = vsel %vm1338, %v1306, 0
      %v1655 = vsel %vm1338, %v1307, 0
      %v1658 = vsel %vm1338, %v1308, 0
      %v1661 = vsel %vm1338, %v1309, 0
      %v1664 = vsel %vm1338, %v1310, 0
      %v1667 = vsel %vm1338, %v1311, 0
      %v1670 = vsel %vm1338, %v1312, 0
      %v1673 = vsel %vm1338, %v1313, 0
      %v1676 = vsel %vm1338, %v1314, 0
      %v1679 = vsel %vm1338, %v1315, 0
      %v1682 = vsel %vm1338, %v1316, 0
      %v1685 = vsel %vm1338, %v1317, 0
      %v1688 = vsel %vm1338, %v1318, 0
      %v1691 = vsel %vm1338, %v1319, 0
      %v1694 = vsel %vm1338, %v1320, 0
      %v1697 = vsel %vm1338, %v1321, 0
      %v1700 = vsel %vm1338, %v1322, 0
      %v1703 = vsel %vm1338, %v1323, 0
      %v1706 = vsel %vm1338, %v1324, 0
      %v1709 = vsel %vm1338, %v1325, 0
      %v1712 = vsel %vm1338, %v1326, 0
      %v1715 = vsel %vm1338, %v1327, 0
      %v1718 = vsel %vm1338, %v1328, 0
      %v1721 = vsel %vm1338, %v1329, 0
      %1723 = vmatpush.msra.mxu0 0.0
      %1724 = vmatpush.msra.mxu0 0.0
      %1725 = vmatpush.msra.mxu0 0.0
      %1726 = vmatpush.msra.mxu0 0.0
      %1727 = vmatpush.msra.mxu0 0.0
      %1728 = vmatpush.msra.mxu0 0.0
      %1729 = vmatpush.msra.mxu0 0.0
      %1730 = vmatpush.msra.mxu0 0.0
      %1731 = vmatpush.msra.mxu0 0.0
      %1732 = vmatpush.msra.mxu0 0.0
      %1733 = vmatpush.msra.mxu0 0.0
      %1734 = vmatpush.msra.mxu0 0.0
      %1735 = vmatpush.msra.mxu0 %v1333
      %1736 = vmatpush.msra.mxu0 %v1332
      %1737 = vmatpush.msra.mxu0 %v1331
      %1738 = vmatpush.msra.mxu0 %v1330
      %1739 = vmatmul.f32.gmra.mxu0 %v1340
      %v1740 = vpop.f32.mrf.mxu0
      %v1741 = vadd.f32 %v1336, %v1740
      %1742 = vmatmul.f32.gmra.mxu0 %v1343
      %v1743 = vpop.f32.mrf.mxu0
      %v1744 = vadd.f32 %v1336, %v1743
      %1745 = vmatmul.f32.gmra.mxu0 %v1346
      %v1746 = vpop.f32.mrf.mxu0
      %v1747 = vadd.f32 %v1336, %v1746
      %1748 = vmatmul.f32.gmra.mxu0 %v1349
      %v1749 = vpop.f32.mrf.mxu0
      %v1750 = vadd.f32 %v1336, %v1749
      %1751 = vmatmul.f32.gmra.mxu0 %v1352
      %v1752 = vpop.f32.mrf.mxu0
      %v1753 = vadd.f32 %v1336, %v1752
      %1754 = vmatmul.f32.gmra.mxu0 %v1355
      %v1755 = vpop.f32.mrf.mxu0
      %v1756 = vadd.f32 %v1336, %v1755
      %1757 = vmatmul.f32.gmra.mxu0 %v1358
      %v1758 = vpop.f32.mrf.mxu0
      %v1759 = vadd.f32 %v1336, %v1758
      %1760 = vmatmul.f32.gmra.mxu0 %v1361
      %v1761 = vpop.f32.mrf.mxu0
      %v1762 = vadd.f32 %v1336, %v1761
      %1763 = vmatmul.f32.gmra.mxu0 %v1364
      %v1764 = vpop.f32.mrf.mxu0
      %v1765 = vadd.f32 %v1336, %v1764
      %1766 = vmatmul.f32.gmra.mxu0 %v1367
      %v1767 = vpop.f32.mrf.mxu0
      %v1768 = vadd.f32 %v1336, %v1767
      %1769 = vmatmul.f32.gmra.mxu0 %v1370
      %v1770 = vpop.f32.mrf.mxu0
      %v1771 = vadd.f32 %v1336, %v1770
      %1772 = vmatmul.f32.gmra.mxu0 %v1373
      %v1773 = vpop.f32.mrf.mxu0
      %v1774 = vadd.f32 %v1336, %v1773
      %1775 = vmatmul.f32.gmra.mxu0 %v1376
      %v1776 = vpop.f32.mrf.mxu0
      %v1777 = vadd.f32 %v1336, %v1776
      %1778 = vmatmul.f32.gmra.mxu0 %v1379
      %v1779 = vpop.f32.mrf.mxu0
      %v1780 = vadd.f32 %v1336, %v1779
      %1781 = vmatmul.f32.gmra.mxu0 %v1382
      %v1782 = vpop.f32.mrf.mxu0
      %v1783 = vadd.f32 %v1336, %v1782
      %1784 = vmatmul.f32.gmra.mxu0 %v1385
      %v1785 = vpop.f32.mrf.mxu0
      %v1786 = vadd.f32 %v1336, %v1785
      %1787 = vmatmul.f32.gmra.mxu0 %v1388
      %v1788 = vpop.f32.mrf.mxu0
      %v1789 = vadd.f32 %v1336, %v1788
      %1790 = vmatmul.f32.gmra.mxu0 %v1391
      %v1791 = vpop.f32.mrf.mxu0
      %v1792 = vadd.f32 %v1336, %v1791
      %1793 = vmatmul.f32.gmra.mxu0 %v1394
      %v1794 = vpop.f32.mrf.mxu0
      %v1795 = vadd.f32 %v1336, %v1794
      %1796 = vmatmul.f32.gmra.mxu0 %v1397
      %v1797 = vpop.f32.mrf.mxu0
      %v1798 = vadd.f32 %v1336, %v1797
      %1799 = vmatmul.f32.gmra.mxu0 %v1400
      %v1800 = vpop.f32.mrf.mxu0
      %v1801 = vadd.f32 %v1336, %v1800
      %1802 = vmatmul.f32.gmra.mxu0 %v1403
      %v1803 = vpop.f32.mrf.mxu0
      %v1804 = vadd.f32 %v1336, %v1803
      %1805 = vmatmul.f32.gmra.mxu0 %v1406
      %v1806 = vpop.f32.mrf.mxu0
      %v1807 = vadd.f32 %v1336, %v1806
      %1808 = vmatmul.f32.gmra.mxu0 %v1409
      %v1809 = vpop.f32.mrf.mxu0
      %v1810 = vadd.f32 %v1336, %v1809
      %1811 = vmatmul.f32.gmra.mxu0 %v1412
      %v1812 = vpop.f32.mrf.mxu0
      %v1813 = vadd.f32 %v1336, %v1812
      %1814 = vmatmul.f32.gmra.mxu0 %v1415
      %v1815 = vpop.f32.mrf.mxu0
      %v1816 = vadd.f32 %v1336, %v1815
      %1817 = vmatmul.f32.gmra.mxu0 %v1418
      %v1818 = vpop.f32.mrf.mxu0
      %v1819 = vadd.f32 %v1336, %v1818
      %1820 = vmatmul.f32.gmra.mxu0 %v1421
      %v1821 = vpop.f32.mrf.mxu0
      %v1822 = vadd.f32 %v1336, %v1821
      %1823 = vmatmul.f32.gmra.mxu0 %v1424
      %v1824 = vpop.f32.mrf.mxu0
      %v1825 = vadd.f32 %v1336, %v1824
      %1826 = vmatmul.f32.gmra.mxu0 %v1427
      %v1827 = vpop.f32.mrf.mxu0
      %v1828 = vadd.f32 %v1336, %v1827
      %1829 = vmatmul.f32.gmra.mxu0 %v1430
      %v1830 = vpop.f32.mrf.mxu0
      %v1831 = vadd.f32 %v1336, %v1830
      %1832 = vmatmul.f32.gmra.mxu0 %v1433
      %v1833 = vpop.f32.mrf.mxu0
      %v1834 = vadd.f32 %v1336, %v1833
      %1835 = vmatmul.f32.gmra.mxu0 %v1436
      %v1836 = vpop.f32.mrf.mxu0
      %v1837 = vadd.f32 %v1336, %v1836
      %1838 = vmatmul.f32.gmra.mxu0 %v1439
      %v1839 = vpop.f32.mrf.mxu0
      %v1840 = vadd.f32 %v1336, %v1839
      %1841 = vmatmul.f32.gmra.mxu0 %v1442
      %v1842 = vpop.f32.mrf.mxu0
      %v1843 = vadd.f32 %v1336, %v1842
      %1844 = vmatmul.f32.gmra.mxu0 %v1445
      %v1845 = vpop.f32.mrf.mxu0
      %v1846 = vadd.f32 %v1336, %v1845
      %1847 = vmatmul.f32.gmra.mxu0 %v1448
      %v1848 = vpop.f32.mrf.mxu0
      %v1849 = vadd.f32 %v1336, %v1848
      %1850 = vmatmul.f32.gmra.mxu0 %v1451
      %v1851 = vpop.f32.mrf.mxu0
      %v1852 = vadd.f32 %v1336, %v1851
      %1853 = vmatmul.f32.gmra.mxu0 %v1454
      %v1854 = vpop.f32.mrf.mxu0
      %v1855 = vadd.f32 %v1336, %v1854
      %1856 = vmatmul.f32.gmra.mxu0 %v1457
      %v1857 = vpop.f32.mrf.mxu0
      %v1858 = vadd.f32 %v1336, %v1857
      %1859 = vmatmul.f32.gmra.mxu0 %v1460
      %v1860 = vpop.f32.mrf.mxu0
      %v1861 = vadd.f32 %v1336, %v1860
      %1862 = vmatmul.f32.gmra.mxu0 %v1463
      %v1863 = vpop.f32.mrf.mxu0
      %v1864 = vadd.f32 %v1336, %v1863
      %1865 = vmatmul.f32.gmra.mxu0 %v1466
      %v1866 = vpop.f32.mrf.mxu0
      %v1867 = vadd.f32 %v1336, %v1866
      %1868 = vmatmul.f32.gmra.mxu0 %v1469
      %v1869 = vpop.f32.mrf.mxu0
      %v1870 = vadd.f32 %v1336, %v1869
      %1871 = vmatmul.f32.gmra.mxu0 %v1472
      %v1872 = vpop.f32.mrf.mxu0
      %v1873 = vadd.f32 %v1336, %v1872
      %1874 = vmatmul.f32.gmra.mxu0 %v1475
      %v1875 = vpop.f32.mrf.mxu0
      %v1876 = vadd.f32 %v1336, %v1875
      %1877 = vmatmul.f32.gmra.mxu0 %v1478
      %v1878 = vpop.f32.mrf.mxu0
      %v1879 = vadd.f32 %v1336, %v1878
      %1880 = vmatmul.f32.gmra.mxu0 %v1481
      %v1881 = vpop.f32.mrf.mxu0
      %v1882 = vadd.f32 %v1336, %v1881
      %1883 = vmatmul.f32.gmra.mxu0 %v1484
      %v1884 = vpop.f32.mrf.mxu0
      %v1885 = vadd.f32 %v1336, %v1884
      %1886 = vmatmul.f32.gmra.mxu0 %v1487
      %v1887 = vpop.f32.mrf.mxu0
      %v1888 = vadd.f32 %v1336, %v1887
      %1889 = vmatmul.f32.gmra.mxu0 %v1490
      %v1890 = vpop.f32.mrf.mxu0
      %v1891 = vadd.f32 %v1336, %v1890
      %1892 = vmatmul.f32.gmra.mxu0 %v1493
      %v1893 = vpop.f32.mrf.mxu0
      %v1894 = vadd.f32 %v1336, %v1893
      %1895 = vmatmul.f32.gmra.mxu0 %v1496
      %v1896 = vpop.f32.mrf.mxu0
      %v1897 = vadd.f32 %v1336, %v1896
      %1898 = vmatmul.f32.gmra.mxu0 %v1499
      %v1899 = vpop.f32.mrf.mxu0
      %v1900 = vadd.f32 %v1336, %v1899
      %1901 = vmatmul.f32.gmra.mxu0 %v1502
      %v1902 = vpop.f32.mrf.mxu0
      %v1903 = vadd.f32 %v1336, %v1902
      %1904 = vmatmul.f32.gmra.mxu0 %v1505
      %v1905 = vpop.f32.mrf.mxu0
      %v1906 = vadd.f32 %v1336, %v1905
      %1907 = vmatmul.f32.gmra.mxu0 %v1508
      %v1908 = vpop.f32.mrf.mxu0
      %v1909 = vadd.f32 %v1336, %v1908
      %1910 = vmatmul.f32.gmra.mxu0 %v1511
      %v1911 = vpop.f32.mrf.mxu0
      %v1912 = vadd.f32 %v1336, %v1911
      %1913 = vmatmul.f32.gmra.mxu0 %v1514
      %v1914 = vpop.f32.mrf.mxu0
      %v1915 = vadd.f32 %v1336, %v1914
      %1916 = vmatmul.f32.gmra.mxu0 %v1517
      %v1917 = vpop.f32.mrf.mxu0
      %v1918 = vadd.f32 %v1336, %v1917
      %1919 = vmatmul.f32.gmra.mxu0 %v1520
      %v1920 = vpop.f32.mrf.mxu0
      %v1921 = vadd.f32 %v1336, %v1920
      %1922 = vmatmul.f32.gmra.mxu0 %v1523
      %v1923 = vpop.f32.mrf.mxu0
      %v1924 = vadd.f32 %v1336, %v1923
      %1925 = vmatmul.f32.gmra.mxu0 %v1526
      %v1926 = vpop.f32.mrf.mxu0
      %v1927 = vadd.f32 %v1336, %v1926
      %1928 = vmatmul.f32.gmra.mxu0 %v1529
      %v1929 = vpop.f32.mrf.mxu0
      %v1930 = vadd.f32 %v1336, %v1929
      %1931 = vmatmul.f32.gmra.mxu0 %v1532
      %v1932 = vpop.f32.mrf.mxu0
      %v1933 = vadd.f32 %v1336, %v1932
      %1934 = vmatmul.f32.gmra.mxu0 %v1535
      %v1935 = vpop.f32.mrf.mxu0
      %v1936 = vadd.f32 %v1336, %v1935
      %1937 = vmatmul.f32.gmra.mxu0 %v1538
      %v1938 = vpop.f32.mrf.mxu0
      %v1939 = vadd.f32 %v1336, %v1938
      %1940 = vmatmul.f32.gmra.mxu0 %v1541
      %v1941 = vpop.f32.mrf.mxu0
      %v1942 = vadd.f32 %v1336, %v1941
      %1943 = vmatmul.f32.gmra.mxu0 %v1544
      %v1944 = vpop.f32.mrf.mxu0
      %v1945 = vadd.f32 %v1336, %v1944
      %1946 = vmatmul.f32.gmra.mxu0 %v1547
      %v1947 = vpop.f32.mrf.mxu0
      %v1948 = vadd.f32 %v1336, %v1947
      %1949 = vmatmul.f32.gmra.mxu0 %v1550
      %v1950 = vpop.f32.mrf.mxu0
      %v1951 = vadd.f32 %v1336, %v1950
      %1952 = vmatmul.f32.gmra.mxu0 %v1553
      %v1953 = vpop.f32.mrf.mxu0
      %v1954 = vadd.f32 %v1336, %v1953
      %1955 = vmatmul.f32.gmra.mxu0 %v1556
      %v1956 = vpop.f32.mrf.mxu0
      %v1957 = vadd.f32 %v1336, %v1956
      %1958 = vmatmul.f32.gmra.mxu0 %v1559
      %v1959 = vpop.f32.mrf.mxu0
      %v1960 = vadd.f32 %v1336, %v1959
      %1961 = vmatmul.f32.gmra.mxu0 %v1562
      %v1962 = vpop.f32.mrf.mxu0
      %v1963 = vadd.f32 %v1336, %v1962
      %1964 = vmatmul.f32.gmra.mxu0 %v1565
      %v1965 = vpop.f32.mrf.mxu0
      %v1966 = vadd.f32 %v1336, %v1965
      %1967 = vmatmul.f32.gmra.mxu0 %v1568
      %v1968 = vpop.f32.mrf.mxu0
      %v1969 = vadd.f32 %v1336, %v1968
      %1970 = vmatmul.f32.gmra.mxu0 %v1571
      %v1971 = vpop.f32.mrf.mxu0
      %v1972 = vadd.f32 %v1336, %v1971
      %1973 = vmatmul.f32.gmra.mxu0 %v1574
      %v1974 = vpop.f32.mrf.mxu0
      %v1975 = vadd.f32 %v1336, %v1974
      %1976 = vmatmul.f32.gmra.mxu0 %v1577
      %v1977 = vpop.f32.mrf.mxu0
      %v1978 = vadd.f32 %v1336, %v1977
      %1979 = vmatmul.f32.gmra.mxu0 %v1580
      %v1980 = vpop.f32.mrf.mxu0
      %v1981 = vadd.f32 %v1336, %v1980
      %1982 = vmatmul.f32.gmra.mxu0 %v1583
      %v1983 = vpop.f32.mrf.mxu0
      %v1984 = vadd.f32 %v1336, %v1983
      %1985 = vmatmul.f32.gmra.mxu0 %v1586
      %v1986 = vpop.f32.mrf.mxu0
      %v1987 = vadd.f32 %v1336, %v1986
      %1988 = vmatmul.f32.gmra.mxu0 %v1589
      %v1989 = vpop.f32.mrf.mxu0
      %v1990 = vadd.f32 %v1336, %v1989
      %1991 = vmatmul.f32.gmra.mxu0 %v1592
      %v1992 = vpop.f32.mrf.mxu0
      %v1993 = vadd.f32 %v1336, %v1992
      %1994 = vmatmul.f32.gmra.mxu0 %v1595
      %v1995 = vpop.f32.mrf.mxu0
      %v1996 = vadd.f32 %v1336, %v1995
      %1997 = vmatmul.f32.gmra.mxu0 %v1598
      %v1998 = vpop.f32.mrf.mxu0
      %v1999 = vadd.f32 %v1336, %v1998
      %2000 = vmatmul.f32.gmra.mxu0 %v1601
      %v2001 = vpop.f32.mrf.mxu0
      %v2002 = vadd.f32 %v1336, %v2001
      %2003 = vmatmul.f32.gmra.mxu0 %v1604
      %v2004 = vpop.f32.mrf.mxu0
      %v2005 = vadd.f32 %v1336, %v2004
      %2006 = vmatmul.f32.gmra.mxu0 %v1607
      %v2007 = vpop.f32.mrf.mxu0
      %v2008 = vadd.f32 %v1336, %v2007
      %2009 = vmatmul.f32.gmra.mxu0 %v1610
      %v2010 = vpop.f32.mrf.mxu0
      %v2011 = vadd.f32 %v1336, %v2010
      %2012 = vmatmul.f32.gmra.mxu0 %v1613
      %v2013 = vpop.f32.mrf.mxu0
      %v2014 = vadd.f32 %v1336, %v2013
      %2015 = vmatmul.f32.gmra.mxu0 %v1616
      %v2016 = vpop.f32.mrf.mxu0
      %v2017 = vadd.f32 %v1336, %v2016
      %2018 = vmatmul.f32.gmra.mxu0 %v1619
      %v2019 = vpop.f32.mrf.mxu0
      %v2020 = vadd.f32 %v1336, %v2019
      %2021 = vmatmul.f32.gmra.mxu0 %v1622
      %v2022 = vpop.f32.mrf.mxu0
      %v2023 = vadd.f32 %v1336, %v2022
      %2024 = vmatmul.f32.gmra.mxu0 %v1625
      %v2025 = vpop.f32.mrf.mxu0
      %v2026 = vadd.f32 %v1336, %v2025
      %2027 = vmatmul.f32.gmra.mxu0 %v1628
      %v2028 = vpop.f32.mrf.mxu0
      %v2029 = vadd.f32 %v1336, %v2028
      %2030 = vmatmul.f32.gmra.mxu0 %v1631
      %v2031 = vpop.f32.mrf.mxu0
      %v2032 = vadd.f32 %v1336, %v2031
      %2033 = vmatmul.f32.gmra.mxu0 %v1634
      %v2034 = vpop.f32.mrf.mxu0
      %v2035 = vadd.f32 %v1336, %v2034
      %2036 = vmatmul.f32.gmra.mxu0 %v1637
      %v2037 = vpop.f32.mrf.mxu0
      %v2038 = vadd.f32 %v1336, %v2037
      %2039 = vmatmul.f32.gmra.mxu0 %v1640
      %v2040 = vpop.f32.mrf.mxu0
      %v2041 = vadd.f32 %v1336, %v2040
      %2042 = vmatmul.f32.gmra.mxu0 %v1643
      %v2043 = vpop.f32.mrf.mxu0
      %v2044 = vadd.f32 %v1336, %v2043
      %2045 = vmatmul.f32.gmra.mxu0 %v1646
      %v2046 = vpop.f32.mrf.mxu0
      %v2047 = vadd.f32 %v1336, %v2046
      %2048 = vmatmul.f32.gmra.mxu0 %v1649
      %v2049 = vpop.f32.mrf.mxu0
      %v2050 = vadd.f32 %v1336, %v2049
      %2051 = vmatmul.f32.gmra.mxu0 %v1652
      %v2052 = vpop.f32.mrf.mxu0
      %v2053 = vadd.f32 %v1336, %v2052
      %2054 = vmatmul.f32.gmra.mxu0 %v1655
      %v2055 = vpop.f32.mrf.mxu0
      %v2056 = vadd.f32 %v1336, %v2055
      %2057 = vmatmul.f32.gmra.mxu0 %v1658
      %v2058 = vpop.f32.mrf.mxu0
      %v2059 = vadd.f32 %v1336, %v2058
      %2060 = vmatmul.f32.gmra.mxu0 %v1661
      %v2061 = vpop.f32.mrf.mxu0
      %v2062 = vadd.f32 %v1336, %v2061
      %2063 = vmatmul.f32.gmra.mxu0 %v1664
      %v2064 = vpop.f32.mrf.mxu0
      %v2065 = vadd.f32 %v1336, %v2064
      %2066 = vmatmul.f32.gmra.mxu0 %v1667
      %v2067 = vpop.f32.mrf.mxu0
      %v2068 = vadd.f32 %v1336, %v2067
      %2069 = vmatmul.f32.gmra.mxu0 %v1670
      %v2070 = vpop.f32.mrf.mxu0
      %v2071 = vadd.f32 %v1336, %v2070
      %2072 = vmatmul.f32.gmra.mxu0 %v1673
      %v2073 = vpop.f32.mrf.mxu0
      %v2074 = vadd.f32 %v1336, %v2073
      %2075 = vmatmul.f32.gmra.mxu0 %v1676
      %v2076 = vpop.f32.mrf.mxu0
      %v2077 = vadd.f32 %v1336, %v2076
      %2078 = vmatmul.f32.gmra.mxu0 %v1679
      %v2079 = vpop.f32.mrf.mxu0
      %v2080 = vadd.f32 %v1336, %v2079
      %2081 = vmatmul.f32.gmra.mxu0 %v1682
      %v2082 = vpop.f32.mrf.mxu0
      %v2083 = vadd.f32 %v1336, %v2082
      %2084 = vmatmul.f32.gmra.mxu0 %v1685
      %v2085 = vpop.f32.mrf.mxu0
      %v2086 = vadd.f32 %v1336, %v2085
      %2087 = vmatmul.f32.gmra.mxu0 %v1688
      %v2088 = vpop.f32.mrf.mxu0
      %v2089 = vadd.f32 %v1336, %v2088
      %2090 = vmatmul.f32.gmra.mxu0 %v1691
      %v2091 = vpop.f32.mrf.mxu0
      %v2092 = vadd.f32 %v1336, %v2091
      %2093 = vmatmul.f32.gmra.mxu0 %v1694
      %v2094 = vpop.f32.mrf.mxu0
      %v2095 = vadd.f32 %v1336, %v2094
      %2096 = vmatmul.f32.gmra.mxu0 %v1697
      %v2097 = vpop.f32.mrf.mxu0
      %v2098 = vadd.f32 %v1336, %v2097
      %2099 = vmatmul.f32.gmra.mxu0 %v1700
      %v2100 = vpop.f32.mrf.mxu0
      %v2101 = vadd.f32 %v1336, %v2100
      %2102 = vmatmul.f32.gmra.mxu0 %v1703
      %v2103 = vpop.f32.mrf.mxu0
      %v2104 = vadd.f32 %v1336, %v2103
      %2105 = vmatmul.f32.gmra.mxu0 %v1706
      %v2106 = vpop.f32.mrf.mxu0
      %v2107 = vadd.f32 %v1336, %v2106
      %2108 = vmatmul.f32.gmra.mxu0 %v1709
      %v2109 = vpop.f32.mrf.mxu0
      %v2110 = vadd.f32 %v1336, %v2109
      %2111 = vmatmul.f32.gmra.mxu0 %v1712
      %v2112 = vpop.f32.mrf.mxu0
      %v2113 = vadd.f32 %v1336, %v2112
      %2114 = vmatmul.f32.gmra.mxu0 %v1715
      %v2115 = vpop.f32.mrf.mxu0
      %v2116 = vadd.f32 %v1336, %v2115
      %2117 = vmatmul.f32.gmra.mxu0 %v1718
      %v2118 = vpop.f32.mrf.mxu0
      %v2119 = vadd.f32 %v1336, %v2118
      %2120 = vmatmul.f32.gmra.mxu0 %v1721
      %v2121 = vpop.f32.mrf.mxu0
      %v2122 = vadd.f32 %v1336, %v2121
      %2123 = vdwg.mxu0
      %v2124 = vmax.f32 %v1741, 0.0
      %v2125 = vmax.f32 %v1744, 0.0
      %v2126 = vmax.f32 %v1747, 0.0
      %v2127 = vmax.f32 %v1750, 0.0
      %v2128 = vmax.f32 %v1753, 0.0
      %v2129 = vmax.f32 %v1756, 0.0
      %v2130 = vmax.f32 %v1759, 0.0
      %v2131 = vmax.f32 %v1762, 0.0
      %v2132 = vmax.f32 %v1765, 0.0
      %v2133 = vmax.f32 %v1768, 0.0
      %v2134 = vmax.f32 %v1771, 0.0
      %v2135 = vmax.f32 %v1774, 0.0
      %v2136 = vmax.f32 %v1777, 0.0
      %v2137 = vmax.f32 %v1780, 0.0
      %v2138 = vmax.f32 %v1783, 0.0
      %v2139 = vmax.f32 %v1786, 0.0
      %v2140 = vmax.f32 %v1789, 0.0
      %v2141 = vmax.f32 %v1792, 0.0
      %v2142 = vmax.f32 %v1795, 0.0
      %v2143 = vmax.f32 %v1798, 0.0
      %v2144 = vmax.f32 %v1801, 0.0
      %v2145 = vmax.f32 %v1804, 0.0
      %v2146 = vmax.f32 %v1807, 0.0
      %v2147 = vmax.f32 %v1810, 0.0
      %v2148 = vmax.f32 %v1813, 0.0
      %v2149 = vmax.f32 %v1816, 0.0
      %v2150 = vmax.f32 %v1819, 0.0
      %v2151 = vmax.f32 %v1822, 0.0
      %v2152 = vmax.f32 %v1825, 0.0
      %v2153 = vmax.f32 %v1828, 0.0
      %v2154 = vmax.f32 %v1831, 0.0
      %v2155 = vmax.f32 %v1834, 0.0
      %v2156 = vmax.f32 %v1837, 0.0
      %v2157 = vmax.f32 %v1840, 0.0
      %v2158 = vmax.f32 %v1843, 0.0
      %v2159 = vmax.f32 %v1846, 0.0
      %v2160 = vmax.f32 %v1849, 0.0
      %v2161 = vmax.f32 %v1852, 0.0
      %v2162 = vmax.f32 %v1855, 0.0
      %v2163 = vmax.f32 %v1858, 0.0
      %v2164 = vmax.f32 %v1861, 0.0
      %v2165 = vmax.f32 %v1864, 0.0
      %v2166 = vmax.f32 %v1867, 0.0
      %v2167 = vmax.f32 %v1870, 0.0
      %v2168 = vmax.f32 %v1873, 0.0
      %v2169 = vmax.f32 %v1876, 0.0
      %v2170 = vmax.f32 %v1879, 0.0
      %v2171 = vmax.f32 %v1882, 0.0
      %v2172 = vmax.f32 %v1885, 0.0
      %v2173 = vmax.f32 %v1888, 0.0
      %v2174 = vmax.f32 %v1891, 0.0
      %v2175 = vmax.f32 %v1894, 0.0
      %v2176 = vmax.f32 %v1897, 0.0
      %v2177 = vmax.f32 %v1900, 0.0
      %v2178 = vmax.f32 %v1903, 0.0
      %v2179 = vmax.f32 %v1906, 0.0
      %v2180 = vmax.f32 %v1909, 0.0
      %v2181 = vmax.f32 %v1912, 0.0
      %v2182 = vmax.f32 %v1915, 0.0
      %v2183 = vmax.f32 %v1918, 0.0
      %v2184 = vmax.f32 %v1921, 0.0
      %v2185 = vmax.f32 %v1924, 0.0
      %v2186 = vmax.f32 %v1927, 0.0
      %v2187 = vmax.f32 %v1930, 0.0
      %v2188 = vmax.f32 %v1933, 0.0
      %v2189 = vmax.f32 %v1936, 0.0
      %v2190 = vmax.f32 %v1939, 0.0
      %v2191 = vmax.f32 %v1942, 0.0
      %v2192 = vmax.f32 %v1945, 0.0
      %v2193 = vmax.f32 %v1948, 0.0
      %v2194 = vmax.f32 %v1951, 0.0
      %v2195 = vmax.f32 %v1954, 0.0
      %v2196 = vmax.f32 %v1957, 0.0
      %v2197 = vmax.f32 %v1960, 0.0
      %v2198 = vmax.f32 %v1963, 0.0
      %v2199 = vmax.f32 %v1966, 0.0
      %v2200 = vmax.f32 %v1969, 0.0
      %v2201 = vmax.f32 %v1972, 0.0
      %v2202 = vmax.f32 %v1975, 0.0
      %v2203 = vmax.f32 %v1978, 0.0
      %v2204 = vmax.f32 %v1981, 0.0
      %v2205 = vmax.f32 %v1984, 0.0
      %v2206 = vmax.f32 %v1987, 0.0
      %v2207 = vmax.f32 %v1990, 0.0
      %v2208 = vmax.f32 %v1993, 0.0
      %v2209 = vmax.f32 %v1996, 0.0
      %v2210 = vmax.f32 %v1999, 0.0
      %v2211 = vmax.f32 %v2002, 0.0
      %v2212 = vmax.f32 %v2005, 0.0
      %v2213 = vmax.f32 %v2008, 0.0
      %v2214 = vmax.f32 %v2011, 0.0
      %v2215 = vmax.f32 %v2014, 0.0
      %v2216 = vmax.f32 %v2017, 0.0
      %v2217 = vmax.f32 %v2020, 0.0
      %v2218 = vmax.f32 %v2023, 0.0
      %v2219 = vmax.f32 %v2026, 0.0
      %v2220 = vmax.f32 %v2029, 0.0
      %v2221 = vmax.f32 %v2032, 0.0
      %v2222 = vmax.f32 %v2035, 0.0
      %v2223 = vmax.f32 %v2038, 0.0
      %v2224 = vmax.f32 %v2041, 0.0
      %v2225 = vmax.f32 %v2044, 0.0
      %v2226 = vmax.f32 %v2047, 0.0
      %v2227 = vmax.f32 %v2050, 0.0
      %v2228 = vmax.f32 %v2053, 0.0
      %v2229 = vmax.f32 %v2056, 0.0
      %v2230 = vmax.f32 %v2059, 0.0
      %v2231 = vmax.f32 %v2062, 0.0
      %v2232 = vmax.f32 %v2065, 0.0
      %v2233 = vmax.f32 %v2068, 0.0
      %v2234 = vmax.f32 %v2071, 0.0
      %v2235 = vmax.f32 %v2074, 0.0
      %v2236 = vmax.f32 %v2077, 0.0
      %v2237 = vmax.f32 %v2080, 0.0
      %v2238 = vmax.f32 %v2083, 0.0
      %v2239 = vmax.f32 %v2086, 0.0
      %v2240 = vmax.f32 %v2089, 0.0
      %v2241 = vmax.f32 %v2092, 0.0
      %v2242 = vmax.f32 %v2095, 0.0
      %v2243 = vmax.f32 %v2098, 0.0
      %v2244 = vmax.f32 %v2101, 0.0
      %v2245 = vmax.f32 %v2104, 0.0
      %v2246 = vmax.f32 %v2107, 0.0
      %v2247 = vmax.f32 %v2110, 0.0
      %v2248 = vmax.f32 %v2113, 0.0
      %v2249 = vmax.f32 %v2116, 0.0
      %v2250 = vmax.f32 %v2119, 0.0
      %v2251 = vmax.f32 %v2122, 0.0
      %v2252 = vld [vmem:[%s5] sm:$0xff]
      %v2253 = vld [vmem:[%s5 + $0x8] sm:$0xff]
      %v2254 = vld [vmem:[%s5 + $0x10] sm:$0xff]
      %v2255 = vld [vmem:[%s5 + $0x18] sm:$0xff]
      %v2256 = vld [vmem:[%s6] sm:$0x1]
      %v2258 = vperm.slane %v2256, 0
      %v2261 = vsel %vm1338, %v2124, 0
      %v2264 = vsel %vm1338, %v2125, 0
      %v2267 = vsel %vm1338, %v2126, 0
      %v2270 = vsel %vm1338, %v2127, 0
      %v2273 = vsel %vm1338, %v2128, 0
      %v2276 = vsel %vm1338, %v2129, 0
      %v2279 = vsel %vm1338, %v2130, 0
      %v2282 = vsel %vm1338, %v2131, 0
      %v2285 = vsel %vm1338, %v2132, 0
      %v2288 = vsel %vm1338, %v2133, 0
      %v2291 = vsel %vm1338, %v2134, 0
      %v2294 = vsel %vm1338, %v2135, 0
      %v2297 = vsel %vm1338, %v2136, 0
      %v2300 = vsel %vm1338, %v2137, 0
      %v2303 = vsel %vm1338, %v2138, 0
      %v2306 = vsel %vm1338, %v2139, 0
      %v2309 = vsel %vm1338, %v2140, 0
      %v2312 = vsel %vm1338, %v2141, 0
      %v2315 = vsel %vm1338, %v2142, 0
      %v2318 = vsel %vm1338, %v2143, 0
      %v2321 = vsel %vm1338, %v2144, 0
      %v2324 = vsel %vm1338, %v2145, 0
      %v2327 = vsel %vm1338, %v2146, 0
      %v2330 = vsel %vm1338, %v2147, 0
      %v2333 = vsel %vm1338, %v2148, 0
      %v2336 = vsel %vm1338, %v2149, 0
      %v2339 = vsel %vm1338, %v2150, 0
      %v2342 = vsel %vm1338, %v2151, 0
      %v2345 = vsel %vm1338, %v2152, 0
      %v2348 = vsel %vm1338, %v2153, 0
      %v2351 = vsel %vm1338, %v2154, 0
      %v2354 = vsel %vm1338, %v2155, 0
      %v2357 = vsel %vm1338, %v2156, 0
      %v2360 = vsel %vm1338, %v2157, 0
      %v2363 = vsel %vm1338, %v2158, 0
      %v2366 = vsel %vm1338, %v2159, 0
      %v2369 = vsel %vm1338, %v2160, 0
      %v2372 = vsel %vm1338, %v2161, 0
      %v2375 = vsel %vm1338, %v2162, 0
      %v2378 = vsel %vm1338, %v2163, 0
      %v2381 = vsel %vm1338, %v2164, 0
      %v2384 = vsel %vm1338, %v2165, 0
      %v2387 = vsel %vm1338, %v2166, 0
      %v2390 = vsel %vm1338, %v2167, 0
      %v2393 = vsel %vm1338, %v2168, 0
      %v2396 = vsel %vm1338, %v2169, 0
      %v2399 = vsel %vm1338, %v2170, 0
      %v2402 = vsel %vm1338, %v2171, 0
      %v2405 = vsel %vm1338, %v2172, 0
      %v2408 = vsel %vm1338, %v2173, 0
      %v2411 = vsel %vm1338, %v2174, 0
      %v2414 = vsel %vm1338, %v2175, 0
      %v2417 = vsel %vm1338, %v2176, 0
      %v2420 = vsel %vm1338, %v2177, 0
      %v2423 = vsel %vm1338, %v2178, 0
      %v2426 = vsel %vm1338, %v2179, 0
      %v2429 = vsel %vm1338, %v2180, 0
      %v2432 = vsel %vm1338, %v2181, 0
      %v2435 = vsel %vm1338, %v2182, 0
      %v2438 = vsel %vm1338, %v2183, 0
      %v2441 = vsel %vm1338, %v2184, 0
      %v2444 = vsel %vm1338, %v2185, 0
      %v2447 = vsel %vm1338, %v2186, 0
      %v2450 = vsel %vm1338, %v2187, 0
      %v2453 = vsel %vm1338, %v2188, 0
      %v2456 = vsel %vm1338, %v2189, 0
      %v2459 = vsel %vm1338, %v2190, 0
      %v2462 = vsel %vm1338, %v2191, 0
      %v2465 = vsel %vm1338, %v2192, 0
      %v2468 = vsel %vm1338, %v2193, 0
      %v2471 = vsel %vm1338, %v2194, 0
      %v2474 = vsel %vm1338, %v2195, 0
      %v2477 = vsel %vm1338, %v2196, 0
      %v2480 = vsel %vm1338, %v2197, 0
      %v2483 = vsel %vm1338, %v2198, 0
      %v2486 = vsel %vm1338, %v2199, 0
      %v2489 = vsel %vm1338, %v2200, 0
      %v2492 = vsel %vm1338, %v2201, 0
      %v2495 = vsel %vm1338, %v2202, 0
      %v2498 = vsel %vm1338, %v2203, 0
      %v2501 = vsel %vm1338, %v2204, 0
      %v2504 = vsel %vm1338, %v2205, 0
      %v2507 = vsel %vm1338, %v2206, 0
      %v2510 = vsel %vm1338, %v2207, 0
      %v2513 = vsel %vm1338, %v2208, 0
      %v2516 = vsel %vm1338, %v2209, 0
      %v2519 = vsel %vm1338, %v2210, 0
      %v2522 = vsel %vm1338, %v2211, 0
      %v2525 = vsel %vm1338, %v2212, 0
      %v2528 = vsel %vm1338, %v2213, 0
      %v2531 = vsel %vm1338, %v2214, 0
      %v2534 = vsel %vm1338, %v2215, 0
      %v2537 = vsel %vm1338, %v2216, 0
      %v2540 = vsel %vm1338, %v2217, 0
      %v2543 = vsel %vm1338, %v2218, 0
      %v2546 = vsel %vm1338, %v2219, 0
      %v2549 = vsel %vm1338, %v2220, 0
      %v2552 = vsel %vm1338, %v2221, 0
      %v2555 = vsel %vm1338, %v2222, 0
      %v2558 = vsel %vm1338, %v2223, 0
      %v2561 = vsel %vm1338, %v2224, 0
      %v2564 = vsel %vm1338, %v2225, 0
      %v2567 = vsel %vm1338, %v2226, 0
      %v2570 = vsel %vm1338, %v2227, 0
      %v2573 = vsel %vm1338, %v2228, 0
      %v2576 = vsel %vm1338, %v2229, 0
      %v2579 = vsel %vm1338, %v2230, 0
      %v2582 = vsel %vm1338, %v2231, 0
      %v2585 = vsel %vm1338, %v2232, 0
      %v2588 = vsel %vm1338, %v2233, 0
      %v2591 = vsel %vm1338, %v2234, 0
      %v2594 = vsel %vm1338, %v2235, 0
      %v2597 = vsel %vm1338, %v2236, 0
      %v2600 = vsel %vm1338, %v2237, 0
      %v2603 = vsel %vm1338, %v2238, 0
      %v2606 = vsel %vm1338, %v2239, 0
      %v2609 = vsel %vm1338, %v2240, 0
      %v2612 = vsel %vm1338, %v2241, 0
      %v2615 = vsel %vm1338, %v2242, 0
      %v2618 = vsel %vm1338, %v2243, 0
      %v2621 = vsel %vm1338, %v2244, 0
      %v2624 = vsel %vm1338, %v2245, 0
      %v2627 = vsel %vm1338, %v2246, 0
      %v2630 = vsel %vm1338, %v2247, 0
      %v2633 = vsel %vm1338, %v2248, 0
      %v2636 = vsel %vm1338, %v2249, 0
      %v2639 = vsel %vm1338, %v2250, 0
      %v2642 = vsel %vm1338, %v2251, 0
      %2644 = vmatpush.msra.mxu0 0.0
      %2645 = vmatpush.msra.mxu0 0.0
      %2646 = vmatpush.msra.mxu0 0.0
      %2647 = vmatpush.msra.mxu0 0.0
      %2648 = vmatpush.msra.mxu0 0.0
      %2649 = vmatpush.msra.mxu0 0.0
      %2650 = vmatpush.msra.mxu0 0.0
      %2651 = vmatpush.msra.mxu0 0.0
      %2652 = vmatpush.msra.mxu0 0.0
      %2653 = vmatpush.msra.mxu0 0.0
      %2654 = vmatpush.msra.mxu0 0.0
      %2655 = vmatpush.msra.mxu0 0.0
      %2656 = vmatpush.msra.mxu0 %v2255
      %2657 = vmatpush.msra.mxu0 %v2254
      %2658 = vmatpush.msra.mxu0 %v2253
      %2659 = vmatpush.msra.mxu0 %v2252
      %2660 = vmatmul.f32.gmra.mxu0 %v2261
      %v2661 = vpop.f32.mrf.mxu0
      %v2662 = vadd.f32 %v2258, %v2661
      %2663 = vmatmul.f32.gmra.mxu0 %v2264
      %v2664 = vpop.f32.mrf.mxu0
      %v2665 = vadd.f32 %v2258, %v2664
      %2666 = vmatmul.f32.gmra.mxu0 %v2267
      %v2667 = vpop.f32.mrf.mxu0
      %v2668 = vadd.f32 %v2258, %v2667
      %2669 = vmatmul.f32.gmra.mxu0 %v2270
      %v2670 = vpop.f32.mrf.mxu0
      %v2671 = vadd.f32 %v2258, %v2670
      %2672 = vmatmul.f32.gmra.mxu0 %v2273
      %v2673 = vpop.f32.mrf.mxu0
      %v2674 = vadd.f32 %v2258, %v2673
      %2675 = vmatmul.f32.gmra.mxu0 %v2276
      %v2676 = vpop.f32.mrf.mxu0
      %v2677 = vadd.f32 %v2258, %v2676
      %2678 = vmatmul.f32.gmra.mxu0 %v2279
      %v2679 = vpop.f32.mrf.mxu0
      %v2680 = vadd.f32 %v2258, %v2679
      %2681 = vmatmul.f32.gmra.mxu0 %v2282
      %v2682 = vpop.f32.mrf.mxu0
      %v2683 = vadd.f32 %v2258, %v2682
      %2684 = vmatmul.f32.gmra.mxu0 %v2285
      %v2685 = vpop.f32.mrf.mxu0
      %v2686 = vadd.f32 %v2258, %v2685
      %2687 = vmatmul.f32.gmra.mxu0 %v2288
      %v2688 = vpop.f32.mrf.mxu0
      %v2689 = vadd.f32 %v2258, %v2688
      %2690 = vmatmul.f32.gmra.mxu0 %v2291
      %v2691 = vpop.f32.mrf.mxu0
      %v2692 = vadd.f32 %v2258, %v2691
      %2693 = vmatmul.f32.gmra.mxu0 %v2294
      %v2694 = vpop.f32.mrf.mxu0
      %v2695 = vadd.f32 %v2258, %v2694
      %2696 = vmatmul.f32.gmra.mxu0 %v2297
      %v2697 = vpop.f32.mrf.mxu0
      %v2698 = vadd.f32 %v2258, %v2697
      %2699 = vmatmul.f32.gmra.mxu0 %v2300
      %v2700 = vpop.f32.mrf.mxu0
      %v2701 = vadd.f32 %v2258, %v2700
      %2702 = vmatmul.f32.gmra.mxu0 %v2303
      %v2703 = vpop.f32.mrf.mxu0
      %v2704 = vadd.f32 %v2258, %v2703
      %2705 = vmatmul.f32.gmra.mxu0 %v2306
      %v2706 = vpop.f32.mrf.mxu0
      %v2707 = vadd.f32 %v2258, %v2706
      %2708 = vmatmul.f32.gmra.mxu0 %v2309
      %v2709 = vpop.f32.mrf.mxu0
      %v2710 = vadd.f32 %v2258, %v2709
      %2711 = vmatmul.f32.gmra.mxu0 %v2312
      %v2712 = vpop.f32.mrf.mxu0
      %v2713 = vadd.f32 %v2258, %v2712
      %2714 = vmatmul.f32.gmra.mxu0 %v2315
      %v2715 = vpop.f32.mrf.mxu0
      %v2716 = vadd.f32 %v2258, %v2715
      %2717 = vmatmul.f32.gmra.mxu0 %v2318
      %v2718 = vpop.f32.mrf.mxu0
      %v2719 = vadd.f32 %v2258, %v2718
      %2720 = vmatmul.f32.gmra.mxu0 %v2321
      %v2721 = vpop.f32.mrf.mxu0
      %v2722 = vadd.f32 %v2258, %v2721
      %2723 = vmatmul.f32.gmra.mxu0 %v2324
      %v2724 = vpop.f32.mrf.mxu0
      %v2725 = vadd.f32 %v2258, %v2724
      %2726 = vmatmul.f32.gmra.mxu0 %v2327
      %v2727 = vpop.f32.mrf.mxu0
      %v2728 = vadd.f32 %v2258, %v2727
      %2729 = vmatmul.f32.gmra.mxu0 %v2330
      %v2730 = vpop.f32.mrf.mxu0
      %v2731 = vadd.f32 %v2258, %v2730
      %2732 = vmatmul.f32.gmra.mxu0 %v2333
      %v2733 = vpop.f32.mrf.mxu0
      %v2734 = vadd.f32 %v2258, %v2733
      %2735 = vmatmul.f32.gmra.mxu0 %v2336
      %v2736 = vpop.f32.mrf.mxu0
      %v2737 = vadd.f32 %v2258, %v2736
      %2738 = vmatmul.f32.gmra.mxu0 %v2339
      %v2739 = vpop.f32.mrf.mxu0
      %v2740 = vadd.f32 %v2258, %v2739
      %2741 = vmatmul.f32.gmra.mxu0 %v2342
      %v2742 = vpop.f32.mrf.mxu0
      %v2743 = vadd.f32 %v2258, %v2742
      %2744 = vmatmul.f32.gmra.mxu0 %v2345
      %v2745 = vpop.f32.mrf.mxu0
      %v2746 = vadd.f32 %v2258, %v2745
      %2747 = vmatmul.f32.gmra.mxu0 %v2348
      %v2748 = vpop.f32.mrf.mxu0
      %v2749 = vadd.f32 %v2258, %v2748
      %2750 = vmatmul.f32.gmra.mxu0 %v2351
      %v2751 = vpop.f32.mrf.mxu0
      %v2752 = vadd.f32 %v2258, %v2751
      %2753 = vmatmul.f32.gmra.mxu0 %v2354
      %v2754 = vpop.f32.mrf.mxu0
      %v2755 = vadd.f32 %v2258, %v2754
      %2756 = vmatmul.f32.gmra.mxu0 %v2357
      %v2757 = vpop.f32.mrf.mxu0
      %v2758 = vadd.f32 %v2258, %v2757
      %2759 = vmatmul.f32.gmra.mxu0 %v2360
      %v2760 = vpop.f32.mrf.mxu0
      %v2761 = vadd.f32 %v2258, %v2760
      %2762 = vmatmul.f32.gmra.mxu0 %v2363
      %v2763 = vpop.f32.mrf.mxu0
      %v2764 = vadd.f32 %v2258, %v2763
      %2765 = vmatmul.f32.gmra.mxu0 %v2366
      %v2766 = vpop.f32.mrf.mxu0
      %v2767 = vadd.f32 %v2258, %v2766
      %2768 = vmatmul.f32.gmra.mxu0 %v2369
      %v2769 = vpop.f32.mrf.mxu0
      %v2770 = vadd.f32 %v2258, %v2769
      %2771 = vmatmul.f32.gmra.mxu0 %v2372
      %v2772 = vpop.f32.mrf.mxu0
      %v2773 = vadd.f32 %v2258, %v2772
      %2774 = vmatmul.f32.gmra.mxu0 %v2375
      %v2775 = vpop.f32.mrf.mxu0
      %v2776 = vadd.f32 %v2258, %v2775
      %2777 = vmatmul.f32.gmra.mxu0 %v2378
      %v2778 = vpop.f32.mrf.mxu0
      %v2779 = vadd.f32 %v2258, %v2778
      %2780 = vmatmul.f32.gmra.mxu0 %v2381
      %v2781 = vpop.f32.mrf.mxu0
      %v2782 = vadd.f32 %v2258, %v2781
      %2783 = vmatmul.f32.gmra.mxu0 %v2384
      %v2784 = vpop.f32.mrf.mxu0
      %v2785 = vadd.f32 %v2258, %v2784
      %2786 = vmatmul.f32.gmra.mxu0 %v2387
      %v2787 = vpop.f32.mrf.mxu0
      %v2788 = vadd.f32 %v2258, %v2787
      %2789 = vmatmul.f32.gmra.mxu0 %v2390
      %v2790 = vpop.f32.mrf.mxu0
      %v2791 = vadd.f32 %v2258, %v2790
      %2792 = vmatmul.f32.gmra.mxu0 %v2393
      %v2793 = vpop.f32.mrf.mxu0
      %v2794 = vadd.f32 %v2258, %v2793
      %2795 = vmatmul.f32.gmra.mxu0 %v2396
      %v2796 = vpop.f32.mrf.mxu0
      %v2797 = vadd.f32 %v2258, %v2796
      %2798 = vmatmul.f32.gmra.mxu0 %v2399
      %v2799 = vpop.f32.mrf.mxu0
      %v2800 = vadd.f32 %v2258, %v2799
      %2801 = vmatmul.f32.gmra.mxu0 %v2402
      %v2802 = vpop.f32.mrf.mxu0
      %v2803 = vadd.f32 %v2258, %v2802
      %2804 = vmatmul.f32.gmra.mxu0 %v2405
      %v2805 = vpop.f32.mrf.mxu0
      %v2806 = vadd.f32 %v2258, %v2805
      %2807 = vmatmul.f32.gmra.mxu0 %v2408
      %v2808 = vpop.f32.mrf.mxu0
      %v2809 = vadd.f32 %v2258, %v2808
      %2810 = vmatmul.f32.gmra.mxu0 %v2411
      %v2811 = vpop.f32.mrf.mxu0
      %v2812 = vadd.f32 %v2258, %v2811
      %2813 = vmatmul.f32.gmra.mxu0 %v2414
      %v2814 = vpop.f32.mrf.mxu0
      %v2815 = vadd.f32 %v2258, %v2814
      %2816 = vmatmul.f32.gmra.mxu0 %v2417
      %v2817 = vpop.f32.mrf.mxu0
      %v2818 = vadd.f32 %v2258, %v2817
      %2819 = vmatmul.f32.gmra.mxu0 %v2420
      %v2820 = vpop.f32.mrf.mxu0
      %v2821 = vadd.f32 %v2258, %v2820
      %2822 = vmatmul.f32.gmra.mxu0 %v2423
      %v2823 = vpop.f32.mrf.mxu0
      %v2824 = vadd.f32 %v2258, %v2823
      %2825 = vmatmul.f32.gmra.mxu0 %v2426
      %v2826 = vpop.f32.mrf.mxu0
      %v2827 = vadd.f32 %v2258, %v2826
      %2828 = vmatmul.f32.gmra.mxu0 %v2429
      %v2829 = vpop.f32.mrf.mxu0
      %v2830 = vadd.f32 %v2258, %v2829
      %2831 = vmatmul.f32.gmra.mxu0 %v2432
      %v2832 = vpop.f32.mrf.mxu0
      %v2833 = vadd.f32 %v2258, %v2832
      %2834 = vmatmul.f32.gmra.mxu0 %v2435
      %v2835 = vpop.f32.mrf.mxu0
      %v2836 = vadd.f32 %v2258, %v2835
      %2837 = vmatmul.f32.gmra.mxu0 %v2438
      %v2838 = vpop.f32.mrf.mxu0
      %v2839 = vadd.f32 %v2258, %v2838
      %2840 = vmatmul.f32.gmra.mxu0 %v2441
      %v2841 = vpop.f32.mrf.mxu0
      %v2842 = vadd.f32 %v2258, %v2841
      %2843 = vmatmul.f32.gmra.mxu0 %v2444
      %v2844 = vpop.f32.mrf.mxu0
      %v2845 = vadd.f32 %v2258, %v2844
      %2846 = vmatmul.f32.gmra.mxu0 %v2447
      %v2847 = vpop.f32.mrf.mxu0
      %v2848 = vadd.f32 %v2258, %v2847
      %2849 = vmatmul.f32.gmra.mxu0 %v2450
      %v2850 = vpop.f32.mrf.mxu0
      %v2851 = vadd.f32 %v2258, %v2850
      %2852 = vmatmul.f32.gmra.mxu0 %v2453
      %v2853 = vpop.f32.mrf.mxu0
      %v2854 = vadd.f32 %v2258, %v2853
      %2855 = vmatmul.f32.gmra.mxu0 %v2456
      %v2856 = vpop.f32.mrf.mxu0
      %v2857 = vadd.f32 %v2258, %v2856
      %2858 = vmatmul.f32.gmra.mxu0 %v2459
      %v2859 = vpop.f32.mrf.mxu0
      %v2860 = vadd.f32 %v2258, %v2859
      %2861 = vmatmul.f32.gmra.mxu0 %v2462
      %v2862 = vpop.f32.mrf.mxu0
      %v2863 = vadd.f32 %v2258, %v2862
      %2864 = vmatmul.f32.gmra.mxu0 %v2465
      %v2865 = vpop.f32.mrf.mxu0
      %v2866 = vadd.f32 %v2258, %v2865
      %2867 = vmatmul.f32.gmra.mxu0 %v2468
      %v2868 = vpop.f32.mrf.mxu0
      %v2869 = vadd.f32 %v2258, %v2868
      %2870 = vmatmul.f32.gmra.mxu0 %v2471
      %v2871 = vpop.f32.mrf.mxu0
      %v2872 = vadd.f32 %v2258, %v2871
      %2873 = vmatmul.f32.gmra.mxu0 %v2474
      %v2874 = vpop.f32.mrf.mxu0
      %v2875 = vadd.f32 %v2258, %v2874
      %2876 = vmatmul.f32.gmra.mxu0 %v2477
      %v2877 = vpop.f32.mrf.mxu0
      %v2878 = vadd.f32 %v2258, %v2877
      %2879 = vmatmul.f32.gmra.mxu0 %v2480
      %v2880 = vpop.f32.mrf.mxu0
      %v2881 = vadd.f32 %v2258, %v2880
      %2882 = vmatmul.f32.gmra.mxu0 %v2483
      %v2883 = vpop.f32.mrf.mxu0
      %v2884 = vadd.f32 %v2258, %v2883
      %2885 = vmatmul.f32.gmra.mxu0 %v2486
      %v2886 = vpop.f32.mrf.mxu0
      %v2887 = vadd.f32 %v2258, %v2886
      %2888 = vmatmul.f32.gmra.mxu0 %v2489
      %v2889 = vpop.f32.mrf.mxu0
      %v2890 = vadd.f32 %v2258, %v2889
      %2891 = vmatmul.f32.gmra.mxu0 %v2492
      %v2892 = vpop.f32.mrf.mxu0
      %v2893 = vadd.f32 %v2258, %v2892
      %2894 = vmatmul.f32.gmra.mxu0 %v2495
      %v2895 = vpop.f32.mrf.mxu0
      %v2896 = vadd.f32 %v2258, %v2895
      %2897 = vmatmul.f32.gmra.mxu0 %v2498
      %v2898 = vpop.f32.mrf.mxu0
      %v2899 = vadd.f32 %v2258, %v2898
      %2900 = vmatmul.f32.gmra.mxu0 %v2501
      %v2901 = vpop.f32.mrf.mxu0
      %v2902 = vadd.f32 %v2258, %v2901
      %2903 = vmatmul.f32.gmra.mxu0 %v2504
      %v2904 = vpop.f32.mrf.mxu0
      %v2905 = vadd.f32 %v2258, %v2904
      %2906 = vmatmul.f32.gmra.mxu0 %v2507
      %v2907 = vpop.f32.mrf.mxu0
      %v2908 = vadd.f32 %v2258, %v2907
      %2909 = vmatmul.f32.gmra.mxu0 %v2510
      %v2910 = vpop.f32.mrf.mxu0
      %v2911 = vadd.f32 %v2258, %v2910
      %2912 = vmatmul.f32.gmra.mxu0 %v2513
      %v2913 = vpop.f32.mrf.mxu0
      %v2914 = vadd.f32 %v2258, %v2913
      %2915 = vmatmul.f32.gmra.mxu0 %v2516
      %v2916 = vpop.f32.mrf.mxu0
      %v2917 = vadd.f32 %v2258, %v2916
      %2918 = vmatmul.f32.gmra.mxu0 %v2519
      %v2919 = vpop.f32.mrf.mxu0
      %v2920 = vadd.f32 %v2258, %v2919
      %2921 = vmatmul.f32.gmra.mxu0 %v2522
      %v2922 = vpop.f32.mrf.mxu0
      %v2923 = vadd.f32 %v2258, %v2922
      %2924 = vmatmul.f32.gmra.mxu0 %v2525
      %v2925 = vpop.f32.mrf.mxu0
      %v2926 = vadd.f32 %v2258, %v2925
      %2927 = vmatmul.f32.gmra.mxu0 %v2528
      %v2928 = vpop.f32.mrf.mxu0
      %v2929 = vadd.f32 %v2258, %v2928
      %2930 = vmatmul.f32.gmra.mxu0 %v2531
      %v2931 = vpop.f32.mrf.mxu0
      %v2932 = vadd.f32 %v2258, %v2931
      %2933 = vmatmul.f32.gmra.mxu0 %v2534
      %v2934 = vpop.f32.mrf.mxu0
      %v2935 = vadd.f32 %v2258, %v2934
      %2936 = vmatmul.f32.gmra.mxu0 %v2537
      %v2937 = vpop.f32.mrf.mxu0
      %v2938 = vadd.f32 %v2258, %v2937
      %2939 = vmatmul.f32.gmra.mxu0 %v2540
      %v2940 = vpop.f32.mrf.mxu0
      %v2941 = vadd.f32 %v2258, %v2940
      %2942 = vmatmul.f32.gmra.mxu0 %v2543
      %v2943 = vpop.f32.mrf.mxu0
      %v2944 = vadd.f32 %v2258, %v2943
      %2945 = vmatmul.f32.gmra.mxu0 %v2546
      %v2946 = vpop.f32.mrf.mxu0
      %v2947 = vadd.f32 %v2258, %v2946
      %2948 = vmatmul.f32.gmra.mxu0 %v2549
      %v2949 = vpop.f32.mrf.mxu0
      %v2950 = vadd.f32 %v2258, %v2949
      %2951 = vmatmul.f32.gmra.mxu0 %v2552
      %v2952 = vpop.f32.mrf.mxu0
      %v2953 = vadd.f32 %v2258, %v2952
      %2954 = vmatmul.f32.gmra.mxu0 %v2555
      %v2955 = vpop.f32.mrf.mxu0
      %v2956 = vadd.f32 %v2258, %v2955
      %2957 = vmatmul.f32.gmra.mxu0 %v2558
      %v2958 = vpop.f32.mrf.mxu0
      %v2959 = vadd.f32 %v2258, %v2958
      %2960 = vmatmul.f32.gmra.mxu0 %v2561
      %v2961 = vpop.f32.mrf.mxu0
      %v2962 = vadd.f32 %v2258, %v2961
      %2963 = vmatmul.f32.gmra.mxu0 %v2564
      %v2964 = vpop.f32.mrf.mxu0
      %v2965 = vadd.f32 %v2258, %v2964
      %2966 = vmatmul.f32.gmra.mxu0 %v2567
      %v2967 = vpop.f32.mrf.mxu0
      %v2968 = vadd.f32 %v2258, %v2967
      %2969 = vmatmul.f32.gmra.mxu0 %v2570
      %v2970 = vpop.f32.mrf.mxu0
      %v2971 = vadd.f32 %v2258, %v2970
      %2972 = vmatmul.f32.gmra.mxu0 %v2573
      %v2973 = vpop.f32.mrf.mxu0
      %v2974 = vadd.f32 %v2258, %v2973
      %2975 = vmatmul.f32.gmra.mxu0 %v2576
      %v2976 = vpop.f32.mrf.mxu0
      %v2977 = vadd.f32 %v2258, %v2976
      %2978 = vmatmul.f32.gmra.mxu0 %v2579
      %v2979 = vpop.f32.mrf.mxu0
      %v2980 = vadd.f32 %v2258, %v2979
      %2981 = vmatmul.f32.gmra.mxu0 %v2582
      %v2982 = vpop.f32.mrf.mxu0
      %v2983 = vadd.f32 %v2258, %v2982
      %2984 = vmatmul.f32.gmra.mxu0 %v2585
      %v2985 = vpop.f32.mrf.mxu0
      %v2986 = vadd.f32 %v2258, %v2985
      %2987 = vmatmul.f32.gmra.mxu0 %v2588
      %v2988 = vpop.f32.mrf.mxu0
      %v2989 = vadd.f32 %v2258, %v2988
      %2990 = vmatmul.f32.gmra.mxu0 %v2591
      %v2991 = vpop.f32.mrf.mxu0
      %v2992 = vadd.f32 %v2258, %v2991
      %2993 = vmatmul.f32.gmra.mxu0 %v2594
      %v2994 = vpop.f32.mrf.mxu0
      %v2995 = vadd.f32 %v2258, %v2994
      %2996 = vmatmul.f32.gmra.mxu0 %v2597
      %v2997 = vpop.f32.mrf.mxu0
      %v2998 = vadd.f32 %v2258, %v2997
      %2999 = vmatmul.f32.gmra.mxu0 %v2600
      %v3000 = vpop.f32.mrf.mxu0
      %v3001 = vadd.f32 %v2258, %v3000
      %3002 = vmatmul.f32.gmra.mxu0 %v2603
      %v3003 = vpop.f32.mrf.mxu0
      %v3004 = vadd.f32 %v2258, %v3003
      %3005 = vmatmul.f32.gmra.mxu0 %v2606
      %v3006 = vpop.f32.mrf.mxu0
      %v3007 = vadd.f32 %v2258, %v3006
      %3008 = vmatmul.f32.gmra.mxu0 %v2609
      %v3009 = vpop.f32.mrf.mxu0
      %v3010 = vadd.f32 %v2258, %v3009
      %3011 = vmatmul.f32.gmra.mxu0 %v2612
      %v3012 = vpop.f32.mrf.mxu0
      %v3013 = vadd.f32 %v2258, %v3012
      %3014 = vmatmul.f32.gmra.mxu0 %v2615
      %v3015 = vpop.f32.mrf.mxu0
      %v3016 = vadd.f32 %v2258, %v3015
      %3017 = vmatmul.f32.gmra.mxu0 %v2618
      %v3018 = vpop.f32.mrf.mxu0
      %v3019 = vadd.f32 %v2258, %v3018
      %3020 = vmatmul.f32.gmra.mxu0 %v2621
      %v3021 = vpop.f32.mrf.mxu0
      %v3022 = vadd.f32 %v2258, %v3021
      %3023 = vmatmul.f32.gmra.mxu0 %v2624
      %v3024 = vpop.f32.mrf.mxu0
      %v3025 = vadd.f32 %v2258, %v3024
      %3026 = vmatmul.f32.gmra.mxu0 %v2627
      %v3027 = vpop.f32.mrf.mxu0
      %v3028 = vadd.f32 %v2258, %v3027
      %3029 = vmatmul.f32.gmra.mxu0 %v2630
      %v3030 = vpop.f32.mrf.mxu0
      %v3031 = vadd.f32 %v2258, %v3030
      %3032 = vmatmul.f32.gmra.mxu0 %v2633
      %v3033 = vpop.f32.mrf.mxu0
      %v3034 = vadd.f32 %v2258, %v3033
      %3035 = vmatmul.f32.gmra.mxu0 %v2636
      %v3036 = vpop.f32.mrf.mxu0
      %v3037 = vadd.f32 %v2258, %v3036
      %3038 = vmatmul.f32.gmra.mxu0 %v2639
      %v3039 = vpop.f32.mrf.mxu0
      %v3040 = vadd.f32 %v2258, %v3039
      %3041 = vmatmul.f32.gmra.mxu0 %v2642
      %v3042 = vpop.f32.mrf.mxu0
      %v3043 = vadd.f32 %v2258, %v3042
      %3044 = vdwg.mxu0
      %v3045 = vtanh.pop %v2662
      %v3046 = vtanh.pop %v2665
      %v3047 = vtanh.pop %v2668
      %v3048 = vtanh.pop %v2671
      %v3049 = vtanh.pop %v2674
      %v3050 = vtanh.pop %v2677
      %v3051 = vtanh.pop %v2680
      %v3052 = vtanh.pop %v2683
      %v3053 = vtanh.pop %v2686
      %v3054 = vtanh.pop %v2689
      %v3055 = vtanh.pop %v2692
      %v3056 = vtanh.pop %v2695
      %v3057 = vtanh.pop %v2698
      %v3058 = vtanh.pop %v2701
      %v3059 = vtanh.pop %v2704
      %v3060 = vtanh.pop %v2707
      %v3061 = vtanh.pop %v2710
      %v3062 = vtanh.pop %v2713
      %v3063 = vtanh.pop %v2716
      %v3064 = vtanh.pop %v2719
      %v3065 = vtanh.pop %v2722
      %v3066 = vtanh.pop %v2725
      %v3067 = vtanh.pop %v2728
      %v3068 = vtanh.pop %v2731
      %v3069 = vtanh.pop %v2734
      %v3070 = vtanh.pop %v2737
      %v3071 = vtanh.pop %v2740
      %v3072 = vtanh.pop %v2743
      %v3073 = vtanh.pop %v2746
      %v3074 = vtanh.pop %v2749
      %v3075 = vtanh.pop %v2752
      %v3076 = vtanh.pop %v2755
      %v3077 = vtanh.pop %v2758
      %v3078 = vtanh.pop %v2761
      %v3079 = vtanh.pop %v2764
      %v3080 = vtanh.pop %v2767
      %v3081 = vtanh.pop %v2770
      %v3082 = vtanh.pop %v2773
      %v3083 = vtanh.pop %v2776
      %v3084 = vtanh.pop %v2779
      %v3085 = vtanh.pop %v2782
      %v3086 = vtanh.pop %v2785
      %v3087 = vtanh.pop %v2788
      %v3088 = vtanh.pop %v2791
      %v3089 = vtanh.pop %v2794
      %v3090 = vtanh.pop %v2797
      %v3091 = vtanh.pop %v2800
      %v3092 = vtanh.pop %v2803
      %v3093 = vtanh.pop %v2806
      %v3094 = vtanh.pop %v2809
      %v3095 = vtanh.pop %v2812
      %v3096 = vtanh.pop %v2815
      %v3097 = vtanh.pop %v2818
      %v3098 = vtanh.pop %v2821
      %v3099 = vtanh.pop %v2824
      %v3100 = vtanh.pop %v2827
      %v3101 = vtanh.pop %v2830
      %v3102 = vtanh.pop %v2833
      %v3103 = vtanh.pop %v2836
      %v3104 = vtanh.pop %v2839
      %v3105 = vtanh.pop %v2842
      %v3106 = vtanh.pop %v2845
      %v3107 = vtanh.pop %v2848
      %v3108 = vtanh.pop %v2851
      %v3109 = vtanh.pop %v2854
      %v3110 = vtanh.pop %v2857
      %v3111 = vtanh.pop %v2860
      %v3112 = vtanh.pop %v2863
      %v3113 = vtanh.pop %v2866
      %v3114 = vtanh.pop %v2869
      %v3115 = vtanh.pop %v2872
      %v3116 = vtanh.pop %v2875
      %v3117 = vtanh.pop %v2878
      %v3118 = vtanh.pop %v2881
      %v3119 = vtanh.pop %v2884
      %v3120 = vtanh.pop %v2887
      %v3121 = vtanh.pop %v2890
      %v3122 = vtanh.pop %v2893
      %v3123 = vtanh.pop %v2896
      %v3124 = vtanh.pop %v2899
      %v3125 = vtanh.pop %v2902
      %v3126 = vtanh.pop %v2905
      %v3127 = vtanh.pop %v2908
      %v3128 = vtanh.pop %v2911
      %v3129 = vtanh.pop %v2914
      %v3130 = vtanh.pop %v2917
      %v3131 = vtanh.pop %v2920
      %v3132 = vtanh.pop %v2923
      %v3133 = vtanh.pop %v2926
      %v3134 = vtanh.pop %v2929
      %v3135 = vtanh.pop %v2932
      %v3136 = vtanh.pop %v2935
      %v3137 = vtanh.pop %v2938
      %v3138 = vtanh.pop %v2941
      %v3139 = vtanh.pop %v2944
      %v3140 = vtanh.pop %v2947
      %v3141 = vtanh.pop %v2950
      %v3142 = vtanh.pop %v2953
      %v3143 = vtanh.pop %v2956
      %v3144 = vtanh.pop %v2959
      %v3145 = vtanh.pop %v2962
      %v3146 = vtanh.pop %v2965
      %v3147 = vtanh.pop %v2968
      %v3148 = vtanh.pop %v2971
      %v3149 = vtanh.pop %v2974
      %v3150 = vtanh.pop %v2977
      %v3151 = vtanh.pop %v2980
      %v3152 = vtanh.pop %v2983
      %v3153 = vtanh.pop %v2986
      %v3154 = vtanh.pop %v2989
      %v3155 = vtanh.pop %v2992
      %v3156 = vtanh.pop %v2995
      %v3157 = vtanh.pop %v2998
      %v3158 = vtanh.pop %v3001
      %v3159 = vtanh.pop %v3004
      %v3160 = vtanh.pop %v3007
      %v3161 = vtanh.pop %v3010
      %v3162 = vtanh.pop %v3013
      %v3163 = vtanh.pop %v3016
      %v3164 = vtanh.pop %v3019
      %v3165 = vtanh.pop %v3022
      %v3166 = vtanh.pop %v3025
      %v3167 = vtanh.pop %v3028
      %v3168 = vtanh.pop %v3031
      %v3169 = vtanh.pop %v3034
      %v3170 = vtanh.pop %v3037
      %v3171 = vtanh.pop %v3040
      %v3172 = vtanh.pop %v3043
      %vm3173 = vcmask 64512
      %3174 = vst.msk [vmem:[%s280] sm:$0xff] %vm3173, %v3045
      %3175 = vst.msk [vmem:[%s280 + $0x8] sm:$0xff] %vm3173, %v3046
      %3176 = vst.msk [vmem:[%s280 + $0x10] sm:$0xff] %vm3173, %v3047
      %3177 = vst.msk [vmem:[%s280 + $0x18] sm:$0xff] %vm3173, %v3048
      %3178 = vst.msk [vmem:[%s280 + $0x20] sm:$0xff] %vm3173, %v3049
      %3179 = vst.msk [vmem:[%s280 + $0x28] sm:$0xff] %vm3173, %v3050
      %3180 = vst.msk [vmem:[%s280 + $0x30] sm:$0xff] %vm3173, %v3051
      %3181 = vst.msk [vmem:[%s280 + $0x38] sm:$0xff] %vm3173, %v3052
      %3182 = vst.msk [vmem:[%s280 + $0x40] sm:$0xff] %vm3173, %v3053
      %3183 = vst.msk [vmem:[%s280 + $0x48] sm:$0xff] %vm3173, %v3054
      %3184 = vst.msk [vmem:[%s280 + $0x50] sm:$0xff] %vm3173, %v3055
      %3185 = vst.msk [vmem:[%s280 + $0x58] sm:$0xff] %vm3173, %v3056
      %3186 = vst.msk [vmem:[%s280 + $0x60] sm:$0xff] %vm3173, %v3057
      %3187 = vst.msk [vmem:[%s280 + $0x68] sm:$0xff] %vm3173, %v3058
      %3188 = vst.msk [vmem:[%s280 + $0x70] sm:$0xff] %vm3173, %v3059
      %3189 = vst.msk [vmem:[%s280 + $0x78] sm:$0xff] %vm3173, %v3060
      %3190 = vst.msk [vmem:[%s280 + $0x80] sm:$0xff] %vm3173, %v3061
      %3191 = vst.msk [vmem:[%s280 + $0x88] sm:$0xff] %vm3173, %v3062
      %3192 = vst.msk [vmem:[%s280 + $0x90] sm:$0xff] %vm3173, %v3063
      %3193 = vst.msk [vmem:[%s280 + $0x98] sm:$0xff] %vm3173, %v3064
      %3194 = vst.msk [vmem:[%s280 + $0xa0] sm:$0xff] %vm3173, %v3065
      %3195 = vst.msk [vmem:[%s280 + $0xa8] sm:$0xff] %vm3173, %v3066
      %3196 = vst.msk [vmem:[%s280 + $0xb0] sm:$0xff] %vm3173, %v3067
      %3197 = vst.msk [vmem:[%s280 + $0xb8] sm:$0xff] %vm3173, %v3068
      %3198 = vst.msk [vmem:[%s280 + $0xc0] sm:$0xff] %vm3173, %v3069
      %3199 = vst.msk [vmem:[%s280 + $0xc8] sm:$0xff] %vm3173, %v3070
      %3200 = vst.msk [vmem:[%s280 + $0xd0] sm:$0xff] %vm3173, %v3071
      %3201 = vst.msk [vmem:[%s280 + $0xd8] sm:$0xff] %vm3173, %v3072
      %3202 = vst.msk [vmem:[%s280 + $0xe0] sm:$0xff] %vm3173, %v3073
      %3203 = vst.msk [vmem:[%s280 + $0xe8] sm:$0xff] %vm3173, %v3074
      %3204 = vst.msk [vmem:[%s280 + $0xf0] sm:$0xff] %vm3173, %v3075
      %3205 = vst.msk [vmem:[%s280 + $0xf8] sm:$0xff] %vm3173, %v3076
      %3206 = vst.msk [vmem:[%s280 + $0x100] sm:$0xff] %vm3173, %v3077
      %3207 = vst.msk [vmem:[%s280 + $0x108] sm:$0xff] %vm3173, %v3078
      %3208 = vst.msk [vmem:[%s280 + $0x110] sm:$0xff] %vm3173, %v3079
      %3209 = vst.msk [vmem:[%s280 + $0x118] sm:$0xff] %vm3173, %v3080
      %3210 = vst.msk [vmem:[%s280 + $0x120] sm:$0xff] %vm3173, %v3081
      %3211 = vst.msk [vmem:[%s280 + $0x128] sm:$0xff] %vm3173, %v3082
      %3212 = vst.msk [vmem:[%s280 + $0x130] sm:$0xff] %vm3173, %v3083
      %3213 = vst.msk [vmem:[%s280 + $0x138] sm:$0xff] %vm3173, %v3084
      %3214 = vst.msk [vmem:[%s280 + $0x140] sm:$0xff] %vm3173, %v3085
      %3215 = vst.msk [vmem:[%s280 + $0x148] sm:$0xff] %vm3173, %v3086
      %3216 = vst.msk [vmem:[%s280 + $0x150] sm:$0xff] %vm3173, %v3087
      %3217 = vst.msk [vmem:[%s280 + $0x158] sm:$0xff] %vm3173, %v3088
      %3218 = vst.msk [vmem:[%s280 + $0x160] sm:$0xff] %vm3173, %v3089
      %3219 = vst.msk [vmem:[%s280 + $0x168] sm:$0xff] %vm3173, %v3090
      %3220 = vst.msk [vmem:[%s280 + $0x170] sm:$0xff] %vm3173, %v3091
      %3221 = vst.msk [vmem:[%s280 + $0x178] sm:$0xff] %vm3173, %v3092
      %3222 = vst.msk [vmem:[%s280 + $0x180] sm:$0xff] %vm3173, %v3093
      %3223 = vst.msk [vmem:[%s280 + $0x188] sm:$0xff] %vm3173, %v3094
      %3224 = vst.msk [vmem:[%s280 + $0x190] sm:$0xff] %vm3173, %v3095
      %3225 = vst.msk [vmem:[%s280 + $0x198] sm:$0xff] %vm3173, %v3096
      %3226 = vst.msk [vmem:[%s280 + $0x1a0] sm:$0xff] %vm3173, %v3097
      %3227 = vst.msk [vmem:[%s280 + $0x1a8] sm:$0xff] %vm3173, %v3098
      %3228 = vst.msk [vmem:[%s280 + $0x1b0] sm:$0xff] %vm3173, %v3099
      %3229 = vst.msk [vmem:[%s280 + $0x1b8] sm:$0xff] %vm3173, %v3100
      %3230 = vst.msk [vmem:[%s280 + $0x1c0] sm:$0xff] %vm3173, %v3101
      %3231 = vst.msk [vmem:[%s280 + $0x1c8] sm:$0xff] %vm3173, %v3102
      %3232 = vst.msk [vmem:[%s280 + $0x1d0] sm:$0xff] %vm3173, %v3103
      %3233 = vst.msk [vmem:[%s280 + $0x1d8] sm:$0xff] %vm3173, %v3104
      %3234 = vst.msk [vmem:[%s280 + $0x1e0] sm:$0xff] %vm3173, %v3105
      %3235 = vst.msk [vmem:[%s280 + $0x1e8] sm:$0xff] %vm3173, %v3106
      %3236 = vst.msk [vmem:[%s280 + $0x1f0] sm:$0xff] %vm3173, %v3107
      %3237 = vst.msk [vmem:[%s280 + $0x1f8] sm:$0xff] %vm3173, %v3108
      %3238 = vst.msk [vmem:[%s280 + $0x200] sm:$0xff] %vm3173, %v3109
      %3239 = vst.msk [vmem:[%s280 + $0x208] sm:$0xff] %vm3173, %v3110
      %3240 = vst.msk [vmem:[%s280 + $0x210] sm:$0xff] %vm3173, %v3111
      %3241 = vst.msk [vmem:[%s280 + $0x218] sm:$0xff] %vm3173, %v3112
      %3242 = vst.msk [vmem:[%s280 + $0x220] sm:$0xff] %vm3173, %v3113
      %3243 = vst.msk [vmem:[%s280 + $0x228] sm:$0xff] %vm3173, %v3114
      %3244 = vst.msk [vmem:[%s280 + $0x230] sm:$0xff] %vm3173, %v3115
      %3245 = vst.msk [vmem:[%s280 + $0x238] sm:$0xff] %vm3173, %v3116
      %3246 = vst.msk [vmem:[%s280 + $0x240] sm:$0xff] %vm3173, %v3117
      %3247 = vst.msk [vmem:[%s280 + $0x248] sm:$0xff] %vm3173, %v3118
      %3248 = vst.msk [vmem:[%s280 + $0x250] sm:$0xff] %vm3173, %v3119
      %3249 = vst.msk [vmem:[%s280 + $0x258] sm:$0xff] %vm3173, %v3120
      %3250 = vst.msk [vmem:[%s280 + $0x260] sm:$0xff] %vm3173, %v3121
      %3251 = vst.msk [vmem:[%s280 + $0x268] sm:$0xff] %vm3173, %v3122
      %3252 = vst.msk [vmem:[%s280 + $0x270] sm:$0xff] %vm3173, %v3123
      %3253 = vst.msk [vmem:[%s280 + $0x278] sm:$0xff] %vm3173, %v3124
      %3254 = vst.msk [vmem:[%s280 + $0x280] sm:$0xff] %vm3173, %v3125
      %3255 = vst.msk [vmem:[%s280 + $0x288] sm:$0xff] %vm3173, %v3126
      %3256 = vst.msk [vmem:[%s280 + $0x290] sm:$0xff] %vm3173, %v3127
      %3257 = vst.msk [vmem:[%s280 + $0x298] sm:$0xff] %vm3173, %v3128
      %3258 = vst.msk [vmem:[%s280 + $0x2a0] sm:$0xff] %vm3173, %v3129
      %3259 = vst.msk [vmem:[%s280 + $0x2a8] sm:$0xff] %vm3173, %v3130
      %3260 = vst.msk [vmem:[%s280 + $0x2b0] sm:$0xff] %vm3173, %v3131
      %3261 = vst.msk [vmem:[%s280 + $0x2b8] sm:$0xff] %vm3173, %v3132
      %3262 = vst.msk [vmem:[%s280 + $0x2c0] sm:$0xff] %vm3173, %v3133
      %3263 = vst.msk [vmem:[%s280 + $0x2c8] sm:$0xff] %vm3173, %v3134
      %3264 = vst.msk [vmem:[%s280 + $0x2d0] sm:$0xff] %vm3173, %v3135
      %3265 = vst.msk [vmem:[%s280 + $0x2d8] sm:$0xff] %vm3173, %v3136
      %3266 = vst.msk [vmem:[%s280 + $0x2e0] sm:$0xff] %vm3173, %v3137
      %3267 = vst.msk [vmem:[%s280 + $0x2e8] sm:$0xff] %vm3173, %v3138
      %3268 = vst.msk [vmem:[%s280 + $0x2f0] sm:$0xff] %vm3173, %v3139
      %3269 = vst.msk [vmem:[%s280 + $0x2f8] sm:$0xff] %vm3173, %v3140
      %3270 = vst.msk [vmem:[%s280 + $0x300] sm:$0xff] %vm3173, %v3141
      %3271 = vst.msk [vmem:[%s280 + $0x308] sm:$0xff] %vm3173, %v3142
      %3272 = vst.msk [vmem:[%s280 + $0x310] sm:$0xff] %vm3173, %v3143
      %3273 = vst.msk [vmem:[%s280 + $0x318] sm:$0xff] %vm3173, %v3144
      %3274 = vst.msk [vmem:[%s280 + $0x320] sm:$0xff] %vm3173, %v3145
      %3275 = vst.msk [vmem:[%s280 + $0x328] sm:$0xff] %vm3173, %v3146
      %3276 = vst.msk [vmem:[%s280 + $0x330] sm:$0xff] %vm3173, %v3147
      %3277 = vst.msk [vmem:[%s280 + $0x338] sm:$0xff] %vm3173, %v3148
      %3278 = vst.msk [vmem:[%s280 + $0x340] sm:$0xff] %vm3173, %v3149
      %3279 = vst.msk [vmem:[%s280 + $0x348] sm:$0xff] %vm3173, %v3150
      %3280 = vst.msk [vmem:[%s280 + $0x350] sm:$0xff] %vm3173, %v3151
      %3281 = vst.msk [vmem:[%s280 + $0x358] sm:$0xff] %vm3173, %v3152
      %3282 = vst.msk [vmem:[%s280 + $0x360] sm:$0xff] %vm3173, %v3153
      %3283 = vst.msk [vmem:[%s280 + $0x368] sm:$0xff] %vm3173, %v3154
      %3284 = vst.msk [vmem:[%s280 + $0x370] sm:$0xff] %vm3173, %v3155
      %3285 = vst.msk [vmem:[%s280 + $0x378] sm:$0xff] %vm3173, %v3156
      %3286 = vst.msk [vmem:[%s280 + $0x380] sm:$0xff] %vm3173, %v3157
      %3287 = vst.msk [vmem:[%s280 + $0x388] sm:$0xff] %vm3173, %v3158
      %3288 = vst.msk [vmem:[%s280 + $0x390] sm:$0xff] %vm3173, %v3159
      %3289 = vst.msk [vmem:[%s280 + $0x398] sm:$0xff] %vm3173, %v3160
      %3290 = vst.msk [vmem:[%s280 + $0x3a0] sm:$0xff] %vm3173, %v3161
      %3291 = vst.msk [vmem:[%s280 + $0x3a8] sm:$0xff] %vm3173, %v3162
      %3292 = vst.msk [vmem:[%s280 + $0x3b0] sm:$0xff] %vm3173, %v3163
      %3293 = vst.msk [vmem:[%s280 + $0x3b8] sm:$0xff] %vm3173, %v3164
      %3294 = vst.msk [vmem:[%s280 + $0x3c0] sm:$0xff] %vm3173, %v3165
      %3295 = vst.msk [vmem:[%s280 + $0x3c8] sm:$0xff] %vm3173, %v3166
      %3296 = vst.msk [vmem:[%s280 + $0x3d0] sm:$0xff] %vm3173, %v3167
      %3297 = vst.msk [vmem:[%s280 + $0x3d8] sm:$0xff] %vm3173, %v3168
      %3298 = vst.msk [vmem:[%s280 + $0x3e0] sm:$0xff] %vm3173, %v3169
      %3299 = vst.msk [vmem:[%s280 + $0x3e8] sm:$0xff] %vm3173, %v3170
      %3300 = vst.msk [vmem:[%s280 + $0x3f0] sm:$0xff] %vm3173, %v3171
      %3301 = vst.msk [vmem:[%s280 + $0x3f8] sm:$0xff] %vm3173, %v3172
      %s3302 = smul.u32 128, %s18
      %p3303 = scmp.lt.s32.totalorder %s3302, 255
      %s3304 = scalar_select %p3303, %s3302, 255
      %s3305 = smul.addr %s3304, 8
      %s3306 = scalar_lea.vmem %s7, %s3305
      // Predicated region
      $region49: #{tpu_custom_call.1} parent=47 // pred_check
        %p3307 = pneg %p188
      $region50: #{tpu_custom_call.1} parent=47 // pred_check_branch
        %3309 = sbr.rel (%p3307) target = $region52
      $region51: #{tpu_custom_call.1} parent=47 // pred_region
        %s3310 = smul.u32 128, %s18
      $region52: #{tpu_custom_call.1} parent=47 // pred_fallthru
        _
    $region48: #{tpu_custom_call.1} parent=5 // pred_fallthru
      _
    %p3311 = scmp.le.s32.totalorder 2, %s13
    // Predicated region
    $region53: #{tpu_custom_call.1} parent=5 // pred_check
      %p3312 = pneg %p3311
    $region54: #{tpu_custom_call.1} parent=5 // pred_check_branch
      %3314 = sbr.rel (%p3312) target = $region56
    $region55: #{tpu_custom_call.1} parent=5 // pred_region
      %s3315 = ssub.s32 %s13, 2
      // Predicated region
      $region57: #{tpu_custom_call.1} parent=55 // pred_check
        %p3316 = pneg %p194
      $region58: #{tpu_custom_call.1} parent=55 // pred_check_branch
        %3318 = sbr.rel (%p3316) target = $region60
      $region59: #{tpu_custom_call.1} parent=55 // pred_region
        %s3319 = smul.u32 128, %s19
        %p3320 = scmp.lt.s32.totalorder %s3319, 255
        %s3321 = scalar_select %p3320, %s3319, 255
        %s3322 = smul.addr %s3321, 8
        %s3323 = scalar_lea.vmem %s7, %s3322
      $region60: #{tpu_custom_call.1} parent=55 // pred_fallthru
        _
    $region56: #{tpu_custom_call.1} parent=5 // pred_fallthru
      _
  $region6: #{tpu_custom_call.1} parent=0 // loop_footer
    %s17 = sadd.s32 1, %s13
  $region7: #{tpu_custom_call.1} parent=0 // loop_footer_branch
    %12 = sbr.rel target = $region3
  $region8: #{tpu_custom_call.1} parent=0 // loop_exit
    _

</llo_original>
